<compile_context>
chip_gen: v7x
topology: tpu7x:2x2x1
jax: 0.10.0
libtpu: 0.0.40
codegen_flags: <defaults>
</compile_context>

<pallas_src>
import jax
import jax.numpy as jnp
from jax.experimental import pallas as pl
from jax.experimental.pallas import tpu as pltpu


def _make_block_kernel(H, W, BB, Cin, Cout):
    L1 = BB * W * Cin          # lane width of the input activations
    L2 = BB * W * Cout         # lane width after the first pointwise conv
    Lo = BB * (W // 2) * Cout  # lane width of the pooled / skip output

    # rows inside the packed "vecs" array
    TAP1, TAP2, B1, B2, BSK, MASK_L, MASK_R = 0, 9, 18, 19, 20, 21, 22

    def kernel(x_ref, vecs_ref, w1_ref, w2_ref, wsk_ref, rsel_ref, csel_ref, out_ref):
        x = x_ref[0]                                           # (H, L1)

        def vec(row, width):
            return vecs_ref[pl.ds(row, 1), :width]             # (1, width)

        def sep_conv_bn(a, tap_base, C, L, w_ref, bias_row):
            # depthwise 3x3, zero padding=1.  W-boundary zeros are folded into the
            # (pre-masked) tap vectors; H-boundary zeros via concatenated zero rows.
            zrow = jnp.zeros((1, L), jnp.float32)
            shifted_h = (
                jnp.concatenate([zrow, a[:-1, :]], axis=0),    # value from row h-1
                a,                                             # row h
                jnp.concatenate([a[1:, :], zrow], axis=0),     # row h+1
            )
            acc = jnp.zeros_like(a)
            for ky in range(3):
                r = shifted_h[ky]
                r_left = pltpu.roll(r, shift=C, axis=1)        # col w-1 (tap is 0 at w==0)
                r_right = pltpu.roll(r, shift=L - C, axis=1)   # col w+1 (tap is 0 at w==W-1)
                acc = acc + r_left * vec(tap_base + 3 * ky + 0, L)
                acc = acc + r * vec(tap_base + 3 * ky + 1, L)
                acc = acc + r_right * vec(tap_base + 3 * ky + 2, L)
            # pointwise 1x1 conv (+ folded BN scale) as a block-diagonal MXU matmul
            y = jnp.dot(acc, w_ref[...], preferred_element_type=jnp.float32)
            return y + bias_row                                # folded BN bias

        # ---- rep path ----
        h1 = sep_conv_bn(jnp.maximum(x, 0.0), TAP1, Cin, L1, w1_ref, vec(B1, L2))
        h2 = sep_conv_bn(jnp.maximum(h1, 0.0), TAP2, Cout, L2, w2_ref, vec(B2, L2))

        # ---- MaxPool2d(kernel=3, stride=2, padding=1), -inf padding ----
        ninf = jnp.full((1, L2), -jnp.inf, jnp.float32)
        dn = jnp.concatenate([ninf, h2[:-1, :]], axis=0)       # row h-1
        up = jnp.concatenate([h2[1:, :], ninf], axis=0)        # row h+1
        rowmax = jnp.maximum(jnp.maximum(dn, h2), up)          # (H, L2)   finite everywhere
        rsel = rsel_ref[...]                                   # (Hout, H) 0/1 row selector
        rowsub = jnp.dot(rsel, rowmax, preferred_element_type=jnp.float32)   # rows 2h

        left = pltpu.roll(rowsub, shift=Cout, axis=1) + vec(MASK_L, L2)      # col w-1
        right = pltpu.roll(rowsub, shift=L2 - Cout, axis=1) + vec(MASK_R, L2)  # col w+1
        colmax = jnp.maximum(jnp.maximum(left, rowsub), right)               # (Hout, L2)
        pooled = jnp.dot(colmax, csel_ref[...], preferred_element_type=jnp.float32)  # cols 2w

        # ---- skip path: 1x1 conv, stride 2, folded BN ----
        xe = jnp.dot(rsel, x, preferred_element_type=jnp.float32)            # even rows of x
        skip = jnp.dot(xe, wsk_ref[...], preferred_element_type=jnp.float32) # W-stride folded
        skip = skip + vec(BSK, Lo)

        out_ref[0] = (pooled + skip).astype(out_ref.dtype)     # (Hout, Lo) lane-dense store

    return kernel


def block_forward(x_nchw, params, block_b=2):
    """Runs the Pallas Block kernel. Input/output layout matches PyTorch NCHW."""
    x = x_nchw.astype(jnp.float32)
    B, Cin, H, W = x.shape
    Cout = params['wp1'].shape[1]
    Hout, Wout = H // 2, W // 2
    BB = min(block_b, B)
    assert B % BB == 0, "batch must be divisible by the per-step image chunk"
    G = B // BB
    L1, L2, Lo = BB * W * Cin, BB * W * Cout, BB * Wout * Cout

    eps = 1e-5

    def bn_fold(p):
        gamma, beta, mean, var = p
        s = gamma / jnp.sqrt(var + eps)
        return s, beta - mean * s

    s1, b1 = bn_fold(params['bn1'])
    s2, b2 = bn_fold(params['bn2'])
    ssk, bsk = bn_fold(params['bnsk'])

    # BN scale folded into the pointwise / skip weights (one-time host work)
    wp1s = params['wp1'] * s1[None, :]
    wp2s = params['wp2'] * s2[None, :]
    wsks = params['wsk'] * ssk[None, :]

    f32 = jnp.float32
    eye_bb = jnp.eye(BB, dtype=f32)
    # block-diagonal pointwise weights: lane block (b, w) -> lane block (b, w)
    w1_bd = jnp.kron(jnp.eye(BB * W, dtype=f32), wp1s)                         # (L1, L2)
    w2_bd = jnp.kron(jnp.eye(BB * W, dtype=f32), wp2s)                         # (L2, L2)
    # stride-2 column selector (w_in == 2*w_out)
    ssel = (jnp.arange(W)[:, None] == 2 * jnp.arange(Wout)[None, :]).astype(f32)
    wsk_bd = jnp.kron(eye_bb, jnp.kron(ssel, wsks))                            # (L1, Lo)
    csel = jnp.kron(eye_bb, jnp.kron(ssel, jnp.eye(Cout, dtype=f32)))          # (L2, Lo)
    rsel = (2 * jnp.arange(Hout)[:, None] == jnp.arange(H)[None, :]).astype(f32)  # (Hout, H)

    def tiled_taps(wd, C):
        # depthwise 3x3 taps broadcast along the (b, w) lane blocks, with the
        # zero-padding boundary folded in (kx=0 tap is zero where w==0, kx=2 where w==W-1).
        L = BB * W * C
        w_of_lane = (jnp.arange(L) // C) % W
        m_left = (w_of_lane != 0).astype(f32)
        m_right = (w_of_lane != W - 1).astype(f32)
        rows = []
        for ky in range(3):
            for kx in range(3):
                t = jnp.tile(wd[ky, kx], BB * W)
                if kx == 0:
                    t = t * m_left
                elif kx == 2:
                    t = t * m_right
                rows.append(t)
        taps = jnp.stack(rows)                                                 # (9, L)
        return jnp.pad(taps, ((0, 0), (0, L2 - L)))

    taps1 = tiled_taps(params['wd1'], Cin)                                     # (9, L2)
    taps2 = tiled_taps(params['wd2'], Cout)                                    # (9, L2)

    b1_t = jnp.tile(b1, BB * W)
    b2_t = jnp.tile(b2, BB * W)
    bsk_t = jnp.pad(jnp.tile(bsk, BB * Wout), (0, L2 - Lo))
    w_of_lane2 = (jnp.arange(L2) // Cout) % W
    mask_l = jnp.where(w_of_lane2 == 0, -jnp.inf, 0.0).astype(f32)
    mask_r = jnp.where(w_of_lane2 == W - 1, -jnp.inf, 0.0).astype(f32)
    zero_row = jnp.zeros((1, L2), f32)

    # one consolidated "vectors" array: 9+9 depthwise taps, 3 biases, 2 pool masks, pad row
    vecs = jnp.concatenate([taps1, taps2,
                            b1_t[None], b2_t[None], bsk_t[None],
                            mask_l[None], mask_r[None], zero_row], axis=0)     # (24, L2)

    # NCHW -> (G, H, BB*W*Cin): lane index = (image_in_chunk * W + w) * Cin + ci
    x_l = x.transpose(0, 2, 3, 1).reshape(G, BB, H, W, Cin)
    x_l = x_l.transpose(0, 2, 1, 3, 4).reshape(G, H, L1)

    kernel = _make_block_kernel(H, W, BB, Cin, Cout)

    out = pl.pallas_call(
        kernel,
        out_shape=jax.ShapeDtypeStruct((G, Hout, Lo), jnp.float32),
        grid_spec=pltpu.PrefetchScalarGridSpec(
            num_scalar_prefetch=0,
            grid=(G,),
            in_specs=[
                pl.BlockSpec((1, H, L1), lambda g: (g, 0, 0)),     # x (batch chunk)
                pl.BlockSpec((24, L2), lambda g: (0, 0)),          # packed vectors
                pl.BlockSpec((L1, L2), lambda g: (0, 0)),          # pointwise 1 (BN folded)
                pl.BlockSpec((L2, L2), lambda g: (0, 0)),          # pointwise 2 (BN folded)
                pl.BlockSpec((L1, Lo), lambda g: (0, 0)),          # skip 1x1 stride-2 (folded)
                pl.BlockSpec((Hout, H), lambda g: (0, 0)),         # even-row selector
                pl.BlockSpec((L2, Lo), lambda g: (0, 0)),          # even-col selector
            ],
            out_specs=pl.BlockSpec((1, Hout, Lo), lambda g: (g, 0, 0)),
        ),
        compiler_params=pltpu.CompilerParams(
            dimension_semantics=("parallel",)),                    # batch chunks independent
    )(x_l, vecs, w1_bd, w2_bd, wsk_bd, rsel, csel)

    # (G, Hout, BB*Wout*Cout) -> NCHW
    out = out.reshape(G, Hout, BB, Wout, Cout)
    out = out.transpose(0, 2, 4, 1, 3).reshape(B, Cout, Hout, Wout)
    return out


def reference_block(x_nchw, params):
    """Pure-JAX (XLA) reference for correctness checking."""
    x = jnp.transpose(x_nchw, (0, 2, 3, 1)).astype(jnp.float32)
    eps = 1e-5

    def bn(v, p):
        g, b, m, var = p
        return (v - m) / jnp.sqrt(var + eps) * g + b

    def depthwise(v, w):
        C = v.shape[-1]
        rhs = w.reshape(3, 3, 1, C)
        return jax.lax.conv_general_dilated(
            v, rhs, window_strides=(1, 1), padding=((1, 1), (1, 1)),
            dimension_numbers=('NHWC', 'HWIO', 'NHWC'),
            feature_group_count=C)

    a = jnp.maximum(x, 0.0)
    y = depthwise(a, params['wd1'])
    y = jnp.einsum('nhwc,cd->nhwd', y, params['wp1'])
    y = bn(y, params['bn1'])
    y = jnp.maximum(y, 0.0)
    z = depthwise(y, params['wd2'])
    z = jnp.einsum('nhwc,cd->nhwd', z, params['wp2'])
    z = bn(z, params['bn2'])
    pooled = jax.lax.reduce_window(
        z, -jnp.inf, jax.lax.max,
        window_dimensions=(1, 3, 3, 1), window_strides=(1, 2, 2, 1),
        padding=((0, 0), (1, 1), (1, 1), (0, 0)))
    skip = jnp.einsum('nhwc,cd->nhwd', x[:, ::2, ::2, :], params['wsk'])
    skip = bn(skip, params['bnsk'])
    return jnp.transpose(pooled + skip, (0, 3, 1, 2))


if __name__ == "__main__":
    B, Cin, Cout, H, W = 2, 4, 8, 16, 16

    key = jax.random.PRNGKey(0)
    ks = jax.random.split(key, 9)

    def bn_params(k, c):
        k1, k2, k3, k4 = jax.random.split(k, 4)
        gamma = 1.0 + 0.1 * jax.random.normal(k1, (c,), jnp.float32)
        beta = 0.1 * jax.random.normal(k2, (c,), jnp.float32)
        mean = 0.1 * jax.random.normal(k3, (c,), jnp.float32)
        var = jax.random.uniform(k4, (c,), jnp.float32, 0.5, 1.5)
        return (gamma, beta, mean, var)

    params = {
        # depthwise weights stored as [3, 3, C]  (PyTorch conv weight [C,1,3,3] -> [ky,kx,c])
        'wd1': 0.2 * jax.random.normal(ks[0], (3, 3, Cin), jnp.float32),
        # pointwise weights stored as [Cin, Cout] (PyTorch [Cout,Cin,1,1] transposed)
        'wp1': 0.2 * jax.random.normal(ks[1], (Cin, Cout), jnp.float32),
        'bn1': bn_params(ks[2], Cout),
        'wd2': 0.2 * jax.random.normal(ks[3], (3, 3, Cout), jnp.float32),
        'wp2': 0.2 * jax.random.normal(ks[4], (Cout, Cout), jnp.float32),
        'bn2': bn_params(ks[5], Cout),
        'wsk': 0.2 * jax.random.normal(ks[6], (Cin, Cout), jnp.float32),
        'bnsk': bn_params(ks[7], Cout),
    }

    x = jax.random.normal(ks[8], (B, Cin, H, W), jnp.float32)   # NCHW, like PyTorch

    out = jax.block_until_ready(block_forward(x, params))
    ref = jax.block_until_ready(reference_block(x, params))

    assert out.shape == (B, Cout, H // 2, W // 2), out.shape
    if not jnp.allclose(out, ref, rtol=2e-2, atol=2e-2):
        err = float(jnp.max(jnp.abs(out - ref)))
        raise AssertionError(f"kernel/reference mismatch, max abs err = {err}")
    print("KERNEL_OK")
</pallas_src>

<mosaic_0001>
module attributes {stable_mosaic.version = 11 : i64} {
  func.func @kernel(%arg0: i32, %arg1: memref<1x16x128xf32, #tpu.memory_space<vmem>>, %arg2: memref<24x256xf32, #tpu.memory_space<vmem>>, %arg3: memref<128x256xf32, #tpu.memory_space<vmem>>, %arg4: memref<256x256xf32, #tpu.memory_space<vmem>>, %arg5: memref<128x128xf32, #tpu.memory_space<vmem>>, %arg6: memref<8x16xf32, #tpu.memory_space<vmem>>, %arg7: memref<256x128xf32, #tpu.memory_space<vmem>>, %arg8: memref<1x8x128xf32, #tpu.memory_space<vmem>>) attributes {dimension_semantics = [#tpu.dimension_semantics<parallel>], iteration_bounds = array<i64: 1>, scalar_prefetch = 0 : i64, scratch_operands = 0 : i64, tpu.core_type = #tpu.core_type<tc>, window_params = [{transform_indices = @transform_0, window_bounds = array<i64: 1, 16, 128>}, {pipeline_mode = #tpu.pipeline_mode<synchronous>, transform_indices = @transform_1, window_bounds = array<i64: 24, 256>}, {pipeline_mode = #tpu.pipeline_mode<synchronous>, transform_indices = @transform_2, window_bounds = array<i64: 128, 256>}, {pipeline_mode = #tpu.pipeline_mode<synchronous>, transform_indices = @transform_3, window_bounds = array<i64: 256, 256>}, {pipeline_mode = #tpu.pipeline_mode<synchronous>, transform_indices = @transform_4, window_bounds = array<i64: 128, 128>}, {pipeline_mode = #tpu.pipeline_mode<synchronous>, transform_indices = @transform_5, window_bounds = array<i64: 8, 16>}, {pipeline_mode = #tpu.pipeline_mode<synchronous>, transform_indices = @transform_6, window_bounds = array<i64: 256, 128>}, {transform_indices = @transform_7, window_bounds = array<i64: 1, 8, 128>}]} {
    %c0 = arith.constant 0 : index
    %c0_0 = arith.constant 0 : index
    %c0_1 = arith.constant 0 : index
    %0 = vector.load %arg1[%c0, %c0_0, %c0_1] : memref<1x16x128xf32, #tpu.memory_space<vmem>>, vector<1x16x128xf32>
    %1 = vector.shape_cast %0 : vector<1x16x128xf32> to vector<16x128xf32>
    %cst = arith.constant 0.000000e+00 : f32
    %2 = vector.broadcast %cst : f32 to vector<16x128xf32>
    %3 = arith.maximumf %1, %2 : vector<16x128xf32>
    %c18 = arith.constant 18 : index
    %c0_2 = arith.constant 0 : index
    %4 = vector.load %arg2[%c18, %c0_2] : memref<24x256xf32, #tpu.memory_space<vmem>>, vector<1x256xf32>
    %cst_3 = arith.constant 0.000000e+00 : f32
    %5 = vector.broadcast %cst_3 : f32 to vector<1x128xf32>
    %6 = vector.extract_strided_slice %3 {offsets = [0, 0], sizes = [15, 128], strides = [1, 1]} : vector<16x128xf32> to vector<15x128xf32>
    %7 = tpu.concatenate %5, %6 in 0 : vector<1x128xf32>, vector<15x128xf32> -> vector<16x128xf32>
    %8 = vector.extract_strided_slice %3 {offsets = [1, 0], sizes = [15, 128], strides = [1, 1]} : vector<16x128xf32> to vector<15x128xf32>
    %9 = tpu.concatenate %8, %5 in 0 : vector<15x128xf32>, vector<1x128xf32> -> vector<16x128xf32>
    %cst_4 = arith.constant 0.000000e+00 : f32
    %10 = vector.broadcast %cst_4 : f32 to vector<16x128xf32>
    %c4_i32 = arith.constant 4 : i32
    %11 = tpu.dynamic_rotate %7 by %c4_i32 dim 1 : vector<16x128xf32>, i32 -> vector<16x128xf32>
    %c124_i32 = arith.constant 124 : i32
    %12 = tpu.dynamic_rotate %7 by %c124_i32 dim 1 : vector<16x128xf32>, i32 -> vector<16x128xf32>
    %c0_5 = arith.constant 0 : index
    %c0_6 = arith.constant 0 : index
    %13 = vector.load %arg2[%c0_5, %c0_6] : memref<24x256xf32, #tpu.memory_space<vmem>>, vector<1x128xf32>
    %14 = vector.broadcast %13 : vector<1x128xf32> to vector<16x128xf32>
    %15 = arith.mulf %11, %14 : vector<16x128xf32>
    %16 = arith.addf %10, %15 : vector<16x128xf32>
    %c1 = arith.constant 1 : index
    %c0_7 = arith.constant 0 : index
    %17 = vector.load %arg2[%c1, %c0_7] : memref<24x256xf32, #tpu.memory_space<vmem>>, vector<1x128xf32>
    %18 = vector.broadcast %17 : vector<1x128xf32> to vector<16x128xf32>
    %19 = arith.mulf %7, %18 : vector<16x128xf32>
    %20 = arith.addf %16, %19 : vector<16x128xf32>
    %c2 = arith.constant 2 : index
    %c0_8 = arith.constant 0 : index
    %21 = vector.load %arg2[%c2, %c0_8] : memref<24x256xf32, #tpu.memory_space<vmem>>, vector<1x128xf32>
    %22 = vector.broadcast %21 : vector<1x128xf32> to vector<16x128xf32>
    %23 = arith.mulf %12, %22 : vector<16x128xf32>
    %24 = arith.addf %20, %23 : vector<16x128xf32>
    %c4_i32_9 = arith.constant 4 : i32
    %25 = tpu.dynamic_rotate %3 by %c4_i32_9 dim 1 : vector<16x128xf32>, i32 -> vector<16x128xf32>
    %c124_i32_10 = arith.constant 124 : i32
    %26 = tpu.dynamic_rotate %3 by %c124_i32_10 dim 1 : vector<16x128xf32>, i32 -> vector<16x128xf32>
    %c3 = arith.constant 3 : index
    %c0_11 = arith.constant 0 : index
    %27 = vector.load %arg2[%c3, %c0_11] : memref<24x256xf32, #tpu.memory_space<vmem>>, vector<1x128xf32>
    %28 = vector.broadcast %27 : vector<1x128xf32> to vector<16x128xf32>
    %29 = arith.mulf %25, %28 : vector<16x128xf32>
    %30 = arith.addf %24, %29 : vector<16x128xf32>
    %c4 = arith.constant 4 : index
    %c0_12 = arith.constant 0 : index
    %31 = vector.load %arg2[%c4, %c0_12] : memref<24x256xf32, #tpu.memory_space<vmem>>, vector<1x128xf32>
    %32 = vector.broadcast %31 : vector<1x128xf32> to vector<16x128xf32>
    %33 = arith.mulf %3, %32 : vector<16x128xf32>
    %34 = arith.addf %30, %33 : vector<16x128xf32>
    %c5 = arith.constant 5 : index
    %c0_13 = arith.constant 0 : index
    %35 = vector.load %arg2[%c5, %c0_13] : memref<24x256xf32, #tpu.memory_space<vmem>>, vector<1x128xf32>
    %36 = vector.broadcast %35 : vector<1x128xf32> to vector<16x128xf32>
    %37 = arith.mulf %26, %36 : vector<16x128xf32>
    %38 = arith.addf %34, %37 : vector<16x128xf32>
    %c4_i32_14 = arith.constant 4 : i32
    %39 = tpu.dynamic_rotate %9 by %c4_i32_14 dim 1 : vector<16x128xf32>, i32 -> vector<16x128xf32>
    %c124_i32_15 = arith.constant 124 : i32
    %40 = tpu.dynamic_rotate %9 by %c124_i32_15 dim 1 : vector<16x128xf32>, i32 -> vector<16x128xf32>
    %c6 = arith.constant 6 : index
    %c0_16 = arith.constant 0 : index
    %41 = vector.load %arg2[%c6, %c0_16] : memref<24x256xf32, #tpu.memory_space<vmem>>, vector<1x128xf32>
    %42 = vector.broadcast %41 : vector<1x128xf32> to vector<16x128xf32>
    %43 = arith.mulf %39, %42 : vector<16x128xf32>
    %44 = arith.addf %38, %43 : vector<16x128xf32>
    %c7 = arith.constant 7 : index
    %c0_17 = arith.constant 0 : index
    %45 = vector.load %arg2[%c7, %c0_17] : memref<24x256xf32, #tpu.memory_space<vmem>>, vector<1x128xf32>
    %46 = vector.broadcast %45 : vector<1x128xf32> to vector<16x128xf32>
    %47 = arith.mulf %9, %46 : vector<16x128xf32>
    %48 = arith.addf %44, %47 : vector<16x128xf32>
    %c8 = arith.constant 8 : index
    %c0_18 = arith.constant 0 : index
    %49 = vector.load %arg2[%c8, %c0_18] : memref<24x256xf32, #tpu.memory_space<vmem>>, vector<1x128xf32>
    %50 = vector.broadcast %49 : vector<1x128xf32> to vector<16x128xf32>
    %51 = arith.mulf %40, %50 : vector<16x128xf32>
    %52 = arith.addf %48, %51 : vector<16x128xf32>
    %c0_19 = arith.constant 0 : index
    %c0_20 = arith.constant 0 : index
    %53 = vector.load %arg3[%c0_19, %c0_20] : memref<128x256xf32, #tpu.memory_space<vmem>>, vector<128x256xf32>
    %cst_21 = arith.constant dense<0.000000e+00> : vector<16x256xf32>
    %54 = tpu.matmul %52, %53, %cst_21 {dimension_numbers = #tpu.dot_dimension_numbers<[1], [0], [0], [1], [0, 0, 1, 1], [], []>} : vector<16x128xf32>, vector<128x256xf32>, vector<16x256xf32> -> vector<16x256xf32>
    %55 = vector.broadcast %4 : vector<1x256xf32> to vector<16x256xf32>
    %56 = arith.addf %54, %55 : vector<16x256xf32>
    %cst_22 = arith.constant 0.000000e+00 : f32
    %57 = vector.broadcast %cst_22 : f32 to vector<16x256xf32>
    %58 = arith.maximumf %56, %57 : vector<16x256xf32>
    %c19 = arith.constant 19 : index
    %c0_23 = arith.constant 0 : index
    %59 = vector.load %arg2[%c19, %c0_23] : memref<24x256xf32, #tpu.memory_space<vmem>>, vector<1x256xf32>
    %cst_24 = arith.constant 0.000000e+00 : f32
    %60 = vector.broadcast %cst_24 : f32 to vector<1x256xf32>
    %61 = vector.extract_strided_slice %58 {offsets = [0, 0], sizes = [15, 256], strides = [1, 1]} : vector<16x256xf32> to vector<15x256xf32>
    %62 = tpu.concatenate %60, %61 in 0 : vector<1x256xf32>, vector<15x256xf32> -> vector<16x256xf32>
    %63 = vector.extract_strided_slice %58 {offsets = [1, 0], sizes = [15, 256], strides = [1, 1]} : vector<16x256xf32> to vector<15x256xf32>
    %64 = tpu.concatenate %63, %60 in 0 : vector<15x256xf32>, vector<1x256xf32> -> vector<16x256xf32>
    %cst_25 = arith.constant 0.000000e+00 : f32
    %65 = vector.broadcast %cst_25 : f32 to vector<16x256xf32>
    %c8_i32 = arith.constant 8 : i32
    %66 = tpu.dynamic_rotate %62 by %c8_i32 dim 1 : vector<16x256xf32>, i32 -> vector<16x256xf32>
    %c248_i32 = arith.constant 248 : i32
    %67 = tpu.dynamic_rotate %62 by %c248_i32 dim 1 : vector<16x256xf32>, i32 -> vector<16x256xf32>
    %c9 = arith.constant 9 : index
    %c0_26 = arith.constant 0 : index
    %68 = vector.load %arg2[%c9, %c0_26] : memref<24x256xf32, #tpu.memory_space<vmem>>, vector<1x256xf32>
    %69 = vector.broadcast %68 : vector<1x256xf32> to vector<16x256xf32>
    %70 = arith.mulf %66, %69 : vector<16x256xf32>
    %71 = arith.addf %65, %70 : vector<16x256xf32>
    %c10 = arith.constant 10 : index
    %c0_27 = arith.constant 0 : index
    %72 = vector.load %arg2[%c10, %c0_27] : memref<24x256xf32, #tpu.memory_space<vmem>>, vector<1x256xf32>
    %73 = vector.broadcast %72 : vector<1x256xf32> to vector<16x256xf32>
    %74 = arith.mulf %62, %73 : vector<16x256xf32>
    %75 = arith.addf %71, %74 : vector<16x256xf32>
    %c11 = arith.constant 11 : index
    %c0_28 = arith.constant 0 : index
    %76 = vector.load %arg2[%c11, %c0_28] : memref<24x256xf32, #tpu.memory_space<vmem>>, vector<1x256xf32>
    %77 = vector.broadcast %76 : vector<1x256xf32> to vector<16x256xf32>
    %78 = arith.mulf %67, %77 : vector<16x256xf32>
    %79 = arith.addf %75, %78 : vector<16x256xf32>
    %c8_i32_29 = arith.constant 8 : i32
    %80 = tpu.dynamic_rotate %58 by %c8_i32_29 dim 1 : vector<16x256xf32>, i32 -> vector<16x256xf32>
    %c248_i32_30 = arith.constant 248 : i32
    %81 = tpu.dynamic_rotate %58 by %c248_i32_30 dim 1 : vector<16x256xf32>, i32 -> vector<16x256xf32>
    %c12 = arith.constant 12 : index
    %c0_31 = arith.constant 0 : index
    %82 = vector.load %arg2[%c12, %c0_31] : memref<24x256xf32, #tpu.memory_space<vmem>>, vector<1x256xf32>
    %83 = vector.broadcast %82 : vector<1x256xf32> to vector<16x256xf32>
    %84 = arith.mulf %80, %83 : vector<16x256xf32>
    %85 = arith.addf %79, %84 : vector<16x256xf32>
    %c13 = arith.constant 13 : index
    %c0_32 = arith.constant 0 : index
    %86 = vector.load %arg2[%c13, %c0_32] : memref<24x256xf32, #tpu.memory_space<vmem>>, vector<1x256xf32>
    %87 = vector.broadcast %86 : vector<1x256xf32> to vector<16x256xf32>
    %88 = arith.mulf %58, %87 : vector<16x256xf32>
    %89 = arith.addf %85, %88 : vector<16x256xf32>
    %c14 = arith.constant 14 : index
    %c0_33 = arith.constant 0 : index
    %90 = vector.load %arg2[%c14, %c0_33] : memref<24x256xf32, #tpu.memory_space<vmem>>, vector<1x256xf32>
    %91 = vector.broadcast %90 : vector<1x256xf32> to vector<16x256xf32>
    %92 = arith.mulf %81, %91 : vector<16x256xf32>
    %93 = arith.addf %89, %92 : vector<16x256xf32>
    %c8_i32_34 = arith.constant 8 : i32
    %94 = tpu.dynamic_rotate %64 by %c8_i32_34 dim 1 : vector<16x256xf32>, i32 -> vector<16x256xf32>
    %c248_i32_35 = arith.constant 248 : i32
    %95 = tpu.dynamic_rotate %64 by %c248_i32_35 dim 1 : vector<16x256xf32>, i32 -> vector<16x256xf32>
    %c15 = arith.constant 15 : index
    %c0_36 = arith.constant 0 : index
    %96 = vector.load %arg2[%c15, %c0_36] : memref<24x256xf32, #tpu.memory_space<vmem>>, vector<1x256xf32>
    %97 = vector.broadcast %96 : vector<1x256xf32> to vector<16x256xf32>
    %98 = arith.mulf %94, %97 : vector<16x256xf32>
    %99 = arith.addf %93, %98 : vector<16x256xf32>
    %c16 = arith.constant 16 : index
    %c0_37 = arith.constant 0 : index
    %100 = vector.load %arg2[%c16, %c0_37] : memref<24x256xf32, #tpu.memory_space<vmem>>, vector<1x256xf32>
    %101 = vector.broadcast %100 : vector<1x256xf32> to vector<16x256xf32>
    %102 = arith.mulf %64, %101 : vector<16x256xf32>
    %103 = arith.addf %99, %102 : vector<16x256xf32>
    %c17 = arith.constant 17 : index
    %c0_38 = arith.constant 0 : index
    %104 = vector.load %arg2[%c17, %c0_38] : memref<24x256xf32, #tpu.memory_space<vmem>>, vector<1x256xf32>
    %105 = vector.broadcast %104 : vector<1x256xf32> to vector<16x256xf32>
    %106 = arith.mulf %95, %105 : vector<16x256xf32>
    %107 = arith.addf %103, %106 : vector<16x256xf32>
    %c0_39 = arith.constant 0 : index
    %c0_40 = arith.constant 0 : index
    %108 = vector.load %arg4[%c0_39, %c0_40] : memref<256x256xf32, #tpu.memory_space<vmem>>, vector<256x256xf32>
    %cst_41 = arith.constant dense<0.000000e+00> : vector<16x256xf32>
    %109 = tpu.matmul %107, %108, %cst_41 {dimension_numbers = #tpu.dot_dimension_numbers<[1], [0], [0], [1], [0, 0, 1, 1], [], []>} : vector<16x256xf32>, vector<256x256xf32>, vector<16x256xf32> -> vector<16x256xf32>
    %110 = vector.broadcast %59 : vector<1x256xf32> to vector<16x256xf32>
    %111 = arith.addf %109, %110 : vector<16x256xf32>
    %cst_42 = arith.constant 0xFF800000 : f32
    %112 = vector.broadcast %cst_42 : f32 to vector<1x256xf32>
    %113 = vector.extract_strided_slice %111 {offsets = [0, 0], sizes = [15, 256], strides = [1, 1]} : vector<16x256xf32> to vector<15x256xf32>
    %114 = tpu.concatenate %112, %113 in 0 : vector<1x256xf32>, vector<15x256xf32> -> vector<16x256xf32>
    %115 = vector.extract_strided_slice %111 {offsets = [1, 0], sizes = [15, 256], strides = [1, 1]} : vector<16x256xf32> to vector<15x256xf32>
    %116 = tpu.concatenate %115, %112 in 0 : vector<15x256xf32>, vector<1x256xf32> -> vector<16x256xf32>
    %117 = arith.maximumf %114, %111 : vector<16x256xf32>
    %118 = arith.maximumf %117, %116 : vector<16x256xf32>
    %c0_43 = arith.constant 0 : index
    %c0_44 = arith.constant 0 : index
    %119 = vector.load %arg6[%c0_43, %c0_44] : memref<8x16xf32, #tpu.memory_space<vmem>>, vector<8x16xf32>
    %cst_45 = arith.constant dense<0.000000e+00> : vector<8x256xf32>
    %120 = tpu.matmul %119, %118, %cst_45 {dimension_numbers = #tpu.dot_dimension_numbers<[1], [0], [0], [1], [0, 0, 1, 1], [], []>} : vector<8x16xf32>, vector<16x256xf32>, vector<8x256xf32> -> vector<8x256xf32>
    %c8_i32_46 = arith.constant 8 : i32
    %121 = tpu.dynamic_rotate %120 by %c8_i32_46 dim 1 : vector<8x256xf32>, i32 -> vector<8x256xf32>
    %c21 = arith.constant 21 : index
    %c0_47 = arith.constant 0 : index
    %122 = vector.load %arg2[%c21, %c0_47] : memref<24x256xf32, #tpu.memory_space<vmem>>, vector<1x256xf32>
    %123 = vector.broadcast %122 : vector<1x256xf32> to vector<8x256xf32>
    %124 = arith.addf %121, %123 : vector<8x256xf32>
    %c248_i32_48 = arith.constant 248 : i32
    %125 = tpu.dynamic_rotate %120 by %c248_i32_48 dim 1 : vector<8x256xf32>, i32 -> vector<8x256xf32>
    %c22 = arith.constant 22 : index
    %c0_49 = arith.constant 0 : index
    %126 = vector.load %arg2[%c22, %c0_49] : memref<24x256xf32, #tpu.memory_space<vmem>>, vector<1x256xf32>
    %127 = vector.broadcast %126 : vector<1x256xf32> to vector<8x256xf32>
    %128 = arith.addf %125, %127 : vector<8x256xf32>
    %129 = arith.maximumf %124, %120 : vector<8x256xf32>
    %130 = arith.maximumf %129, %128 : vector<8x256xf32>
    %c0_50 = arith.constant 0 : index
    %c0_51 = arith.constant 0 : index
    %131 = vector.load %arg7[%c0_50, %c0_51] : memref<256x128xf32, #tpu.memory_space<vmem>>, vector<256x128xf32>
    %cst_52 = arith.constant dense<0.000000e+00> : vector<8x128xf32>
    %132 = tpu.matmul %130, %131, %cst_52 {dimension_numbers = #tpu.dot_dimension_numbers<[1], [0], [0], [1], [0, 0, 1, 1], [], []>} : vector<8x256xf32>, vector<256x128xf32>, vector<8x128xf32> -> vector<8x128xf32>
    %cst_53 = arith.constant dense<0.000000e+00> : vector<8x128xf32>
    %133 = tpu.matmul %119, %1, %cst_53 {dimension_numbers = #tpu.dot_dimension_numbers<[1], [0], [0], [1], [0, 0, 1, 1], [], []>} : vector<8x16xf32>, vector<16x128xf32>, vector<8x128xf32> -> vector<8x128xf32>
    %c0_54 = arith.constant 0 : index
    %c0_55 = arith.constant 0 : index
    %134 = vector.load %arg5[%c0_54, %c0_55] : memref<128x128xf32, #tpu.memory_space<vmem>>, vector<128x128xf32>
    %cst_56 = arith.constant dense<0.000000e+00> : vector<8x128xf32>
    %135 = tpu.matmul %133, %134, %cst_56 {dimension_numbers = #tpu.dot_dimension_numbers<[1], [0], [0], [1], [0, 0, 1, 1], [], []>} : vector<8x128xf32>, vector<128x128xf32>, vector<8x128xf32> -> vector<8x128xf32>
    %c20 = arith.constant 20 : index
    %c0_57 = arith.constant 0 : index
    %136 = vector.load %arg2[%c20, %c0_57] : memref<24x256xf32, #tpu.memory_space<vmem>>, vector<1x128xf32>
    %137 = vector.broadcast %136 : vector<1x128xf32> to vector<8x128xf32>
    %138 = arith.addf %135, %137 : vector<8x128xf32>
    %139 = arith.addf %132, %138 : vector<8x128xf32>
    %c0_58 = arith.constant 0 : index
    %c0_59 = arith.constant 0 : index
    %c0_60 = arith.constant 0 : index
    %140 = vector.load %arg8[%c0_58, %c0_59, %c0_60] : memref<1x8x128xf32, #tpu.memory_space<vmem>>, vector<1x8x128xf32>
    %141 = vector.shape_cast %140 : vector<1x8x128xf32> to vector<8x128xf32>
    %142 = vector.shape_cast %139 : vector<8x128xf32> to vector<1x8x128xf32>
    tpu.vector_store %arg8[%c0_58, %c0_59, %c0_60], %142 {strides = array<i32>} : memref<1x8x128xf32, #tpu.memory_space<vmem>>, vector<1x8x128xf32>,
    return
  }
  func.func @transform_0(%arg0: i32) -> (i32, i32, i32) {
    %c0_i32 = arith.constant 0 : i32
    %c0_i32_0 = arith.constant 0 : i32
    %c0_i32_1 = arith.constant 0 : i32
    return %arg0, %c0_i32, %c0_i32_0 : i32, i32, i32
  }
  func.func @transform_1(%arg0: i32) -> (i32, i32) {
    %c0_i32 = arith.constant 0 : i32
    %c0_i32_0 = arith.constant 0 : i32
    %c0_i32_1 = arith.constant 0 : i32
    return %c0_i32, %c0_i32_0 : i32, i32
  }
  func.func @transform_2(%arg0: i32) -> (i32, i32) {
    %c0_i32 = arith.constant 0 : i32
    %c0_i32_0 = arith.constant 0 : i32
    %c0_i32_1 = arith.constant 0 : i32
    return %c0_i32, %c0_i32_0 : i32, i32
  }
  func.func @transform_3(%arg0: i32) -> (i32, i32) {
    %c0_i32 = arith.constant 0 : i32
    %c0_i32_0 = arith.constant 0 : i32
    %c0_i32_1 = arith.constant 0 : i32
    return %c0_i32, %c0_i32_0 : i32, i32
  }
  func.func @transform_4(%arg0: i32) -> (i32, i32) {
    %c0_i32 = arith.constant 0 : i32
    %c0_i32_0 = arith.constant 0 : i32
    %c0_i32_1 = arith.constant 0 : i32
    return %c0_i32, %c0_i32_0 : i32, i32
  }
  func.func @transform_5(%arg0: i32) -> (i32, i32) {
    %c0_i32 = arith.constant 0 : i32
    %c0_i32_0 = arith.constant 0 : i32
    %c0_i32_1 = arith.constant 0 : i32
    return %c0_i32, %c0_i32_0 : i32, i32
  }
  func.func @transform_6(%arg0: i32) -> (i32, i32) {
    %c0_i32 = arith.constant 0 : i32
    %c0_i32_0 = arith.constant 0 : i32
    %c0_i32_1 = arith.constant 0 : i32
    return %c0_i32, %c0_i32_0 : i32, i32
  }
  func.func @transform_7(%arg0: i32) -> (i32, i32, i32) {
    %c0_i32 = arith.constant 0 : i32
    %c0_i32_0 = arith.constant 0 : i32
    %c0_i32_1 = arith.constant 0 : i32
    return %arg0, %c0_i32, %c0_i32_0 : i32, i32, i32
  }
}

</mosaic_0001>

<llo_original>
// kernel: tpu_custom_call.1
$region0: #{tpu_custom_call.1}
  #allocation0 [shape = 'u32[]', space=smem, size = 0x4, offset = 0x4, fixed_abs, tag = 'smem constant byte address 0x4 - core index']
  #allocation1 [shape = 'u32[144,128]{1,0:T(1,128)}', space=vmem, size = 0x12000, scoped, tag = 'internal scratch']
  %s0 = inlined_call_operand.hbm [shape: f32[1,16,128], index: 0, kind: input, shape index: {}]
  %s1 = inlined_call_operand.hbm [shape: f32[24,256], index: 1, kind: input, shape index: {}]
  %s2 = inlined_call_operand.hbm [shape: f32[128,256], index: 2, kind: input, shape index: {}]
  %s3 = inlined_call_operand.hbm [shape: f32[256,256], index: 3, kind: input, shape index: {}]
  %s4 = inlined_call_operand.hbm [shape: f32[128,128], index: 4, kind: input, shape index: {}]
  %s5 = inlined_call_operand.vmem [shape: f32[8,16], index: 5, kind: input, shape index: {}]
  %s6 = inlined_call_operand.hbm [shape: f32[256,128], index: 6, kind: input, shape index: {}]
  %s7 = inlined_call_operand.hbm [shape: f32[1,8,128], index: 7, kind: output, shape index: {}]
  %s8 = sld [smem:[#allocation0]]
  $region62: #{tpu_custom_call.1} parent=0
    _
  %s10 = ssub.s32 1, %s8
  %s11 = scalar_select 0, %s10, %s8
  $region1: #{tpu_custom_call.1} parent=0
    #allocation2 [shape = 'u8[8192]{0}', space=vmem, size = 0x2000, scoped, tag = 'input window, operand 0, single buffered']
    #allocation3 [shape = 's32[1]{0}', space=sflag, size = 0x4, scoped, tag = 'scoped memory for tpu_custom_call.1']
    #allocation4 [shape = 's32[1]{0}', space=sflag, size = 0x4, scoped, tag = 'scoped memory for tpu_custom_call.1']
    #allocation5 [shape = 'u8[24576]{0}', space=vmem, size = 0x6000, scoped, tag = 'input window, operand 1, single buffered']
    #allocation6 [shape = 's32[1]{0}', space=sflag, size = 0x4, scoped, tag = 'scoped memory for tpu_custom_call.1']
    #allocation7 [shape = 'u8[131072]{0}', space=vmem, size = 0x20000, scoped, tag = 'input window, operand 2, single buffered']
    #allocation8 [shape = 'u8[262144]{0}', space=vmem, size = 0x40000, scoped, tag = 'input window, operand 3, single buffered']
    #allocation9 [shape = 's32[1]{0}', space=sflag, size = 0x4, scoped, tag = 'scoped memory for tpu_custom_call.1']
    #allocation10 [shape = 'u8[65536]{0}', space=vmem, size = 0x10000, scoped, tag = 'input window, operand 4, single buffered']
    #allocation11 [shape = 'u8[131072]{0}', space=vmem, size = 0x20000, scoped, tag = 'input window, operand 6, single buffered']
    #allocation12 [shape = 's32[1]{0}', space=sflag, size = 0x4, scoped, tag = 'scoped memory for tpu_custom_call.1']
    #allocation13 [shape = 'u8[4096]{0}', space=vmem, size = 0x1000, scoped, tag = 'output window, operand 0, single buffered']
    %12 = vsyncpa [#allocation3], 0
    %13 = vsyncpa [#allocation6], 0
    %14 = vsyncpa [#allocation9], 0
    %15 = vsyncpa [#allocation12], 0
    %16 = vsyncpa [#allocation4], 0
    // Predicated region
    $region2: #{tpu_custom_call.1} parent=1 // pred_check
      _
    $region3: #{tpu_custom_call.1} parent=1 // pred_check_branch
      %18 = sbr.rel (0) target = $region5
    $region4: #{tpu_custom_call.1} parent=1 // pred_region
      %s20 = ssub.s32 256, 256
      %21 = vsyncadd [#allocation3], %s20
      %s22 = sshll.u32 [#allocation2], 4
      %s23 = int_to_ptr.vmem [resolvable:$true] %s22
      %28 = dma.hbm_to_vmem [thread:$0]  %s0, 256, %s23, [#allocation3], 128, 128, 8
    $region5: #{tpu_custom_call.1} parent=1 // pred_fallthru
      _
    // Predicated region
    $region6: #{tpu_custom_call.1} parent=1 // pred_check
      _
    $region7: #{tpu_custom_call.1} parent=1 // pred_check_branch
      %30 = sbr.rel (0) target = $region9
    $region8: #{tpu_custom_call.1} parent=1 // pred_region
      %s32 = ssub.s32 768, 768
      %33 = vsyncadd [#allocation6], %s32
      %s34 = sshll.u32 [#allocation5], 4
      %s35 = int_to_ptr.vmem [resolvable:$true] %s34
      %40 = dma.hbm_to_vmem [thread:$0]  %s1, 768, %s35, [#allocation6], 256, 256, 16
    $region9: #{tpu_custom_call.1} parent=1 // pred_fallthru
      _
    // Predicated region
    $region10: #{tpu_custom_call.1} parent=1 // pred_check
      _
    $region11: #{tpu_custom_call.1} parent=1 // pred_check_branch
      %42 = sbr.rel (0) target = $region13
    $region12: #{tpu_custom_call.1} parent=1 // pred_region
      %s44 = ssub.s32 4096, 4096
      %45 = vsyncadd [#allocation6], %s44
      %s46 = sshll.u32 [#allocation7], 4
      %s47 = int_to_ptr.vmem [resolvable:$true] %s46
      %52 = dma.hbm_to_vmem [thread:$0]  %s2, 4096, %s47, [#allocation6], 256, 256, 16
    $region13: #{tpu_custom_call.1} parent=1 // pred_fallthru
      _
    // Predicated region
    $region14: #{tpu_custom_call.1} parent=1 // pred_check
      _
    $region15: #{tpu_custom_call.1} parent=1 // pred_check_branch
      %54 = sbr.rel (0) target = $region17
    $region16: #{tpu_custom_call.1} parent=1 // pred_region
      %s56 = ssub.s32 8192, 8192
      %57 = vsyncadd [#allocation9], %s56
      %s58 = sshll.u32 [#allocation8], 4
      %s59 = int_to_ptr.vmem [resolvable:$true] %s58
      %64 = dma.hbm_to_vmem [thread:$0]  %s3, 8192, %s59, [#allocation9], 256, 256, 16
    $region17: #{tpu_custom_call.1} parent=1 // pred_fallthru
      _
    // Predicated region
    $region18: #{tpu_custom_call.1} parent=1 // pred_check
      _
    $region19: #{tpu_custom_call.1} parent=1 // pred_check_branch
      %66 = sbr.rel (0) target = $region21
    $region20: #{tpu_custom_call.1} parent=1 // pred_region
      %s68 = ssub.s32 2048, 2048
      %69 = vsyncadd [#allocation9], %s68
      %s70 = sshll.u32 [#allocation10], 4
      %s71 = int_to_ptr.vmem [resolvable:$true] %s70
      %76 = dma.hbm_to_vmem [thread:$0]  %s4, 2048, %s71, [#allocation9], 128, 128, 8
    $region21: #{tpu_custom_call.1} parent=1 // pred_fallthru
      _
    // Predicated region
    $region22: #{tpu_custom_call.1} parent=1 // pred_check
      _
    $region23: #{tpu_custom_call.1} parent=1 // pred_check_branch
      %78 = sbr.rel (0) target = $region25
    $region24: #{tpu_custom_call.1} parent=1 // pred_region
      _
    $region25: #{tpu_custom_call.1} parent=1 // pred_fallthru
      _
    // Predicated region
    $region26: #{tpu_custom_call.1} parent=1 // pred_check
      _
    $region27: #{tpu_custom_call.1} parent=1 // pred_check_branch
      %80 = sbr.rel (0) target = $region29
    $region28: #{tpu_custom_call.1} parent=1 // pred_region
      %s82 = ssub.s32 4096, 4096
      %83 = vsyncadd [#allocation12], %s82
      %s84 = sshll.u32 [#allocation11], 4
      %s85 = int_to_ptr.vmem [resolvable:$true] %s84
      %90 = dma.hbm_to_vmem [thread:$0]  %s6, 4096, %s85, [#allocation12], 128, 128, 8
    $region29: #{tpu_custom_call.1} parent=1 // pred_fallthru
      _
    // Predicated region
    $region30: #{tpu_custom_call.1} parent=1 // pred_check
      _
    $region31: #{tpu_custom_call.1} parent=1 // pred_check_branch
      %92 = sbr.rel (0) target = $region33
    $region32: #{tpu_custom_call.1} parent=1 // pred_region
      %93 = dma.done [#allocation3], 256
    $region33: #{tpu_custom_call.1} parent=1 // pred_fallthru
      _
    // Predicated region
    $region34: #{tpu_custom_call.1} parent=1 // pred_check
      _
    $region35: #{tpu_custom_call.1} parent=1 // pred_check_branch
      %95 = sbr.rel (0) target = $region37
    $region36: #{tpu_custom_call.1} parent=1 // pred_region
      %96 = dma.done [#allocation6], 768
    $region37: #{tpu_custom_call.1} parent=1 // pred_fallthru
      _
    // Predicated region
    $region38: #{tpu_custom_call.1} parent=1 // pred_check
      _
    $region39: #{tpu_custom_call.1} parent=1 // pred_check_branch
      %98 = sbr.rel (0) target = $region41
    $region40: #{tpu_custom_call.1} parent=1 // pred_region
      %99 = dma.done [#allocation6], 4096
    $region41: #{tpu_custom_call.1} parent=1 // pred_fallthru
      _
    // Predicated region
    $region42: #{tpu_custom_call.1} parent=1 // pred_check
      _
    $region43: #{tpu_custom_call.1} parent=1 // pred_check_branch
      %101 = sbr.rel (0) target = $region45
    $region44: #{tpu_custom_call.1} parent=1 // pred_region
      %102 = dma.done [#allocation9], 8192
    $region45: #{tpu_custom_call.1} parent=1 // pred_fallthru
      _
    // Predicated region
    $region46: #{tpu_custom_call.1} parent=1 // pred_check
      _
    $region47: #{tpu_custom_call.1} parent=1 // pred_check_branch
      %104 = sbr.rel (0) target = $region49
    $region48: #{tpu_custom_call.1} parent=1 // pred_region
      %105 = dma.done [#allocation9], 2048
    $region49: #{tpu_custom_call.1} parent=1 // pred_fallthru
      _
    // Predicated region
    $region50: #{tpu_custom_call.1} parent=1 // pred_check
      _
    $region51: #{tpu_custom_call.1} parent=1 // pred_check_branch
      %107 = sbr.rel (0) target = $region53
    $region52: #{tpu_custom_call.1} parent=1 // pred_region
      %108 = dma.done [#allocation12], 4096
    $region53: #{tpu_custom_call.1} parent=1 // pred_fallthru
      _
    %v109 = vld [vmem:[#allocation2] sm:$0xff]
    %v110 = vld [vmem:[#allocation2 + $0x8] sm:$0xff]
    %v111 = vmax.f32 %v109, 0.0
    %v112 = vmax.f32 %v110, 0.0
    %s113 = scalar_lea.vmem [#allocation5], 34
    %v114 = vld [vmem:[%s113] ss:$8 sm:$0x3]
    %vm117 = vcmask 1040384
    %v118 = vrot.slane %v111, 7
    %v119 = vrot.slane %v112, 7
    %v120 = vsel %vm117, %v118, %v119
    %v123 = vsel %vm117, 0.0, %v118
    %vm124 = vcmask 1046528
    %v125 = vrot.slane %v111, 1
    %v126 = vrot.slane %v112, 1
    %v127 = vsel %vm124, %v125, %v126
    %v130 = vsel %vm124, %v126, 0.0
    %131 = vrot.lane.b32.xlu0 %v123, 4
    %v132 = vpop.permute.xlu0 %131
    %133 = vrot.lane.b32.xlu0 %v120, 4
    %v134 = vpop.permute.xlu0 %133
    %135 = vrot.lane.b32.xlu0 %v123, 124
    %v136 = vpop.permute.xlu0 %135
    %137 = vrot.lane.b32.xlu0 %v120, 124
    %v138 = vpop.permute.xlu0 %137
    %v139 = vld [vmem:[#allocation5] ss:$0 sm:$0xff]
    %v140 = vmul.f32 %v132, %v139
    %v141 = vmul.f32 %v134, %v139
    %v142 = vadd.f32 %v140, 0.0
    %v143 = vadd.f32 %v141, 0.0
    %v144 = vld [vmem:[#allocation5 + $0x1] ss:$0 sm:$0xff]
    %v145 = vmul.f32 %v123, %v144
    %v146 = vmul.f32 %v120, %v144
    %v147 = vadd.f32 %v142, %v145
    %v148 = vadd.f32 %v143, %v146
    %v149 = vld [vmem:[#allocation5 + $0x2] ss:$0 sm:$0xff]
    %v150 = vmul.f32 %v136, %v149
    %v151 = vmul.f32 %v138, %v149
    %v152 = vadd.f32 %v147, %v150
    %v153 = vadd.f32 %v148, %v151
    %154 = vrot.lane.b32.xlu0 %v111, 4
    %v155 = vpop.permute.xlu0 %154
    %156 = vrot.lane.b32.xlu0 %v112, 4
    %v157 = vpop.permute.xlu0 %156
    %158 = vrot.lane.b32.xlu0 %v111, 124
    %v159 = vpop.permute.xlu0 %158
    %160 = vrot.lane.b32.xlu0 %v112, 124
    %v161 = vpop.permute.xlu0 %160
    %v162 = vld [vmem:[#allocation5 + $0x3] ss:$0 sm:$0xff]
    %v163 = vmul.f32 %v155, %v162
    %v164 = vmul.f32 %v157, %v162
    %v165 = vadd.f32 %v152, %v163
    %v166 = vadd.f32 %v153, %v164
    %v167 = vld [vmem:[#allocation5 + $0x4] ss:$0 sm:$0xff]
    %v168 = vmul.f32 %v111, %v167
    %v169 = vmul.f32 %v112, %v167
    %v170 = vadd.f32 %v165, %v168
    %v171 = vadd.f32 %v166, %v169
    %v172 = vld [vmem:[#allocation5 + $0x5] ss:$0 sm:$0xff]
    %v173 = vmul.f32 %v159, %v172
    %v174 = vmul.f32 %v161, %v172
    %v175 = vadd.f32 %v170, %v173
    %v176 = vadd.f32 %v171, %v174
    %177 = vrot.lane.b32.xlu0 %v127, 4
    %v178 = vpop.permute.xlu0 %177
    %179 = vrot.lane.b32.xlu0 %v130, 4
    %v180 = vpop.permute.xlu0 %179
    %181 = vrot.lane.b32.xlu0 %v127, 124
    %v182 = vpop.permute.xlu0 %181
    %183 = vrot.lane.b32.xlu0 %v130, 124
    %v184 = vpop.permute.xlu0 %183
    %v185 = vld [vmem:[#allocation5 + $0x6] ss:$0 sm:$0xff]
    %v186 = vmul.f32 %v178, %v185
    %v187 = vmul.f32 %v180, %v185
    %v188 = vadd.f32 %v175, %v186
    %v189 = vadd.f32 %v176, %v187
    %v190 = vld [vmem:[#allocation5 + $0x7] ss:$0 sm:$0xff]
    %v191 = vmul.f32 %v127, %v190
    %v192 = vmul.f32 %v130, %v190
    %v193 = vadd.f32 %v188, %v191
    %v194 = vadd.f32 %v189, %v192
    %v195 = vld [vmem:[#allocation5 + $0x10] ss:$0 sm:$0xff]
    %v196 = vmul.f32 %v182, %v195
    %v197 = vmul.f32 %v184, %v195
    %v198 = vadd.f32 %v193, %v196
    %v199 = vadd.f32 %v194, %v197
    %v200 = vld [vmem:[#allocation7] sm:$0xff]
    %v201 = vld [vmem:[#allocation7 + $0x8] sm:$0xff]
    %v202 = vld [vmem:[#allocation7 + $0x10] sm:$0xff]
    %v203 = vld [vmem:[#allocation7 + $0x18] sm:$0xff]
    %v204 = vld [vmem:[#allocation7 + $0x20] sm:$0xff]
    %v205 = vld [vmem:[#allocation7 + $0x28] sm:$0xff]
    %v206 = vld [vmem:[#allocation7 + $0x30] sm:$0xff]
    %v207 = vld [vmem:[#allocation7 + $0x38] sm:$0xff]
    %v208 = vld [vmem:[#allocation7 + $0x40] sm:$0xff]
    %v209 = vld [vmem:[#allocation7 + $0x48] sm:$0xff]
    %v210 = vld [vmem:[#allocation7 + $0x50] sm:$0xff]
    %v211 = vld [vmem:[#allocation7 + $0x58] sm:$0xff]
    %v212 = vld [vmem:[#allocation7 + $0x60] sm:$0xff]
    %v213 = vld [vmem:[#allocation7 + $0x68] sm:$0xff]
    %v214 = vld [vmem:[#allocation7 + $0x70] sm:$0xff]
    %v215 = vld [vmem:[#allocation7 + $0x78] sm:$0xff]
    %v216 = vld [vmem:[#allocation7 + $0x80] sm:$0xff]
    %v217 = vld [vmem:[#allocation7 + $0x88] sm:$0xff]
    %v218 = vld [vmem:[#allocation7 + $0x90] sm:$0xff]
    %v219 = vld [vmem:[#allocation7 + $0x98] sm:$0xff]
    %v220 = vld [vmem:[#allocation7 + $0xa0] sm:$0xff]
    %v221 = vld [vmem:[#allocation7 + $0xa8] sm:$0xff]
    %v222 = vld [vmem:[#allocation7 + $0xb0] sm:$0xff]
    %v223 = vld [vmem:[#allocation7 + $0xb8] sm:$0xff]
    %v224 = vld [vmem:[#allocation7 + $0xc0] sm:$0xff]
    %v225 = vld [vmem:[#allocation7 + $0xc8] sm:$0xff]
    %v226 = vld [vmem:[#allocation7 + $0xd0] sm:$0xff]
    %v227 = vld [vmem:[#allocation7 + $0xd8] sm:$0xff]
    %v228 = vld [vmem:[#allocation7 + $0xe0] sm:$0xff]
    %v229 = vld [vmem:[#allocation7 + $0xe8] sm:$0xff]
    %v230 = vld [vmem:[#allocation7 + $0xf0] sm:$0xff]
    %v231 = vld [vmem:[#allocation7 + $0xf8] sm:$0xff]
    %v233 = vlaneseq
    %v234 = vshrl.u32 %v233, 7
    %v235 = vsub.s32 0, %v234
    %v236 = vrot.slane %v114, %v235
    %v237 = vlaneseq
    %v238 = vshrl.u32 %v237, 7
    %v239 = vsub.s32 1, %v238
    %v240 = vrot.slane %v114, %v239
    %243 = vmatprep.subr.mxu0 %v201
    %244 = vmatpush1.msra.mxu0 %v200
    %245 = vmatprep.subr.mxu0 %v203
    %246 = vmatpush1.msra.mxu0 %v202
    %247 = vmatprep.subr.mxu0 %v205
    %248 = vmatpush1.msra.mxu0 %v204
    %249 = vmatprep.subr.mxu0 %v207
    %250 = vmatpush1.msra.mxu0 %v206
    %251 = vmatprep.subr.mxu0 %v209
    %252 = vmatpush1.msra.mxu0 %v208
    %253 = vmatprep.subr.mxu0 %v211
    %254 = vmatpush1.msra.mxu0 %v210
    %255 = vmatprep.subr.mxu0 %v213
    %256 = vmatpush1.msra.mxu0 %v212
    %257 = vmatprep.subr.mxu0 %v215
    %258 = vmatpush1.msra.mxu0 %v214
    %259 = vmatprep.subr.mxu0 %v217
    %260 = vmatpush1.msra.mxu0 %v216
    %261 = vmatprep.subr.mxu0 %v219
    %262 = vmatpush1.msra.mxu0 %v218
    %263 = vmatprep.subr.mxu0 %v221
    %264 = vmatpush1.msra.mxu0 %v220
    %265 = vmatprep.subr.mxu0 %v223
    %266 = vmatpush1.msra.mxu0 %v222
    %267 = vmatprep.subr.mxu0 %v225
    %268 = vmatpush1.msra.mxu0 %v224
    %269 = vmatprep.subr.mxu0 %v227
    %270 = vmatpush1.msra.mxu0 %v226
    %271 = vmatprep.subr.mxu0 %v229
    %272 = vmatpush1.msra.mxu0 %v228
    %273 = vmatprep.subr.mxu0 %v231
    %274 = vmatpush1.msra.mxu0 %v230
    %275 = vmatprep.subr.mxu0 0.0
    %276 = vmatpush1.msra.mxu0 0.0
    %277 = vmatprep.subr.mxu0 0.0
    %278 = vmatpush1.msra.mxu0 0.0
    %279 = vmatprep.subr.mxu0 0.0
    %280 = vmatpush1.msra.mxu0 0.0
    %281 = vmatprep.subr.mxu0 0.0
    %282 = vmatpush1.msra.mxu0 0.0
    %283 = vmatprep.subr.mxu0 0.0
    %284 = vmatpush1.msra.mxu0 0.0
    %285 = vmatprep.subr.mxu0 0.0
    %286 = vmatpush1.msra.mxu0 0.0
    %287 = vmatprep.subr.mxu0 0.0
    %288 = vmatpush1.msra.mxu0 0.0
    %289 = vmatprep.subr.mxu0 0.0
    %290 = vmatpush1.msra.mxu0 0.0
    %291 = vmatprep.subr.mxu0 0.0
    %292 = vmatpush1.msra.mxu0 0.0
    %293 = vmatprep.subr.mxu0 0.0
    %294 = vmatpush1.msra.mxu0 0.0
    %295 = vmatprep.subr.mxu0 0.0
    %296 = vmatpush1.msra.mxu0 0.0
    %297 = vmatprep.subr.mxu0 0.0
    %298 = vmatpush1.msra.mxu0 0.0
    %299 = vmatprep.subr.mxu0 0.0
    %300 = vmatpush1.msra.mxu0 0.0
    %301 = vmatprep.subr.mxu0 0.0
    %302 = vmatpush1.msra.mxu0 0.0
    %303 = vmatprep.subr.mxu0 0.0
    %304 = vmatpush1.msra.mxu0 0.0
    %305 = vmatprep.subr.mxu0 0.0
    %306 = vmatpush1.msra.mxu0 0.0
    %307 = vmatprep.mubr.f32.mxu0 0.0
    %308 = vmatmul.mubr.f32.gmra.mrb[0].mxu0 %v198
    %v309 = vpop.f32.mrb[0].mxu0
    %v310 = vadd.f32 %v236, %v309
    %v311 = vpop.f32.mrb[0].mxu0
    %v312 = vadd.f32 %v240, %v311
    %313 = vmatprep.mubr.f32.mxu0 0.0
    %314 = vmatmul.mubr.f32.gmra.mrb[0].mxu0 %v199
    %v315 = vpop.f32.mrb[0].mxu0
    %v316 = vadd.f32 %v236, %v315
    %v317 = vpop.f32.mrb[0].mxu0
    %v318 = vadd.f32 %v240, %v317
    %319 = vdwg.mxu0
    %v320 = vmax.f32 %v310, 0.0
    %v321 = vmax.f32 %v312, 0.0
    %v322 = vmax.f32 %v316, 0.0
    %v323 = vmax.f32 %v318, 0.0
    %s324 = scalar_lea.vmem [#allocation5], 35
    %v325 = vld [vmem:[%s324] ss:$8 sm:$0x3]
    %v330 = vrot.slane %v320, 7
    %v331 = vrot.slane %v321, 7
    %v332 = vrot.slane %v322, 7
    %v333 = vsel %vm117, %v330, %v332
    %v334 = vrot.slane %v323, 7
    %v335 = vsel %vm117, %v331, %v334
    %v340 = vsel %vm117, 0.0, %v330
    %v341 = vsel %vm117, 0.0, %v331
    %v342 = vrot.slane %v320, 1
    %v343 = vrot.slane %v322, 1
    %v344 = vsel %vm124, %v342, %v343
    %v345 = vrot.slane %v321, 1
    %v346 = vrot.slane %v323, 1
    %v347 = vsel %vm124, %v345, %v346
    %v352 = vsel %vm124, %v343, 0.0
    %v353 = vsel %vm124, %v346, 0.0
    %354 = vrot.lane.b32.xlu0 %v340, 8
    %v355 = vpop.permute.xlu0 %354
    %356 = vrot.lane.b32.xlu0 %v333, 8
    %v357 = vpop.permute.xlu0 %356
    %358 = vrot.lane.b32.xlu0 %v341, 8
    %v359 = vpop.permute.xlu0 %358
    %360 = vrot.lane.b32.xlu0 %v335, 8
    %v361 = vpop.permute.xlu0 %360
    %v362 = vlaneseq
    %v363 = vand.u32 %v362, 127
    %vm364 = vcmp.lt.s32.totalorder %v363, 8
    %v365 = vsel %vm364, %v355, %v359
    %v366 = vsel %vm364, %v357, %v361
    %v367 = vsel %vm364, %v359, %v355
    %v368 = vsel %vm364, %v361, %v357
    %369 = vrot.lane.b32.xlu0 %v340, 120
    %v370 = vpop.permute.xlu0 %369
    %371 = vrot.lane.b32.xlu0 %v333, 120
    %v372 = vpop.permute.xlu0 %371
    %373 = vrot.lane.b32.xlu0 %v341, 120
    %v374 = vpop.permute.xlu0 %373
    %375 = vrot.lane.b32.xlu0 %v335, 120
    %v376 = vpop.permute.xlu0 %375
    %vm377 = vcmp.lt.s32.totalorder %v363, 120
    %v378 = vsel %vm377, %v370, %v374
    %v379 = vsel %vm377, %v372, %v376
    %v380 = vsel %vm377, %v374, %v370
    %v381 = vsel %vm377, %v376, %v372
    %s382 = scalar_lea.vmem [#allocation5], 17
    %v383 = vld [vmem:[%s382] ss:$8 sm:$0x3]
    %v385 = vlaneseq
    %v386 = vshrl.u32 %v385, 7
    %v387 = vsub.s32 0, %v386
    %v388 = vrot.slane %v383, %v387
    %v389 = vlaneseq
    %v390 = vshrl.u32 %v389, 7
    %v391 = vsub.s32 1, %v390
    %v392 = vrot.slane %v383, %v391
    %v395 = vmul.f32 %v367, %v388
    %v396 = vmul.f32 %v365, %v392
    %v397 = vmul.f32 %v368, %v388
    %v398 = vmul.f32 %v366, %v392
    %v399 = vadd.f32 %v395, 0.0
    %v400 = vadd.f32 %v396, 0.0
    %v401 = vadd.f32 %v397, 0.0
    %v402 = vadd.f32 %v398, 0.0
    %s403 = scalar_lea.vmem [#allocation5], 18
    %v404 = vld [vmem:[%s403] ss:$8 sm:$0x3]
    %v406 = vlaneseq
    %v407 = vshrl.u32 %v406, 7
    %v408 = vsub.s32 0, %v407
    %v409 = vrot.slane %v404, %v408
    %v410 = vlaneseq
    %v411 = vshrl.u32 %v410, 7
    %v412 = vsub.s32 1, %v411
    %v413 = vrot.slane %v404, %v412
    %v416 = vmul.f32 %v340, %v409
    %v417 = vmul.f32 %v341, %v413
    %v418 = vmul.f32 %v333, %v409
    %v419 = vmul.f32 %v335, %v413
    %v420 = vadd.f32 %v399, %v416
    %v421 = vadd.f32 %v400, %v417
    %v422 = vadd.f32 %v401, %v418
    %v423 = vadd.f32 %v402, %v419
    %s424 = scalar_lea.vmem [#allocation5], 19
    %v425 = vld [vmem:[%s424] ss:$8 sm:$0x3]
    %v427 = vlaneseq
    %v428 = vshrl.u32 %v427, 7
    %v429 = vsub.s32 0, %v428
    %v430 = vrot.slane %v425, %v429
    %v431 = vlaneseq
    %v432 = vshrl.u32 %v431, 7
    %v433 = vsub.s32 1, %v432
    %v434 = vrot.slane %v425, %v433
    %v437 = vmul.f32 %v378, %v430
    %v438 = vmul.f32 %v380, %v434
    %v439 = vmul.f32 %v379, %v430
    %v440 = vmul.f32 %v381, %v434
    %v441 = vadd.f32 %v420, %v437
    %v442 = vadd.f32 %v421, %v438
    %v443 = vadd.f32 %v422, %v439
    %v444 = vadd.f32 %v423, %v440
    %445 = vrot.lane.b32.xlu0 %v320, 8
    %v446 = vpop.permute.xlu0 %445
    %447 = vrot.lane.b32.xlu0 %v322, 8
    %v448 = vpop.permute.xlu0 %447
    %449 = vrot.lane.b32.xlu0 %v321, 8
    %v450 = vpop.permute.xlu0 %449
    %451 = vrot.lane.b32.xlu0 %v323, 8
    %v452 = vpop.permute.xlu0 %451
    %v453 = vsel %vm364, %v446, %v450
    %v454 = vsel %vm364, %v448, %v452
    %v455 = vsel %vm364, %v450, %v446
    %v456 = vsel %vm364, %v452, %v448
    %457 = vrot.lane.b32.xlu0 %v320, 120
    %v458 = vpop.permute.xlu0 %457
    %459 = vrot.lane.b32.xlu0 %v322, 120
    %v460 = vpop.permute.xlu0 %459
    %461 = vrot.lane.b32.xlu0 %v321, 120
    %v462 = vpop.permute.xlu0 %461
    %463 = vrot.lane.b32.xlu0 %v323, 120
    %v464 = vpop.permute.xlu0 %463
    %v465 = vsel %vm377, %v458, %v462
    %v466 = vsel %vm377, %v460, %v464
    %v467 = vsel %vm377, %v462, %v458
    %v468 = vsel %vm377, %v464, %v460
    %s469 = scalar_lea.vmem [#allocation5], 20
    %v470 = vld [vmem:[%s469] ss:$8 sm:$0x3]
    %v472 = vlaneseq
    %v473 = vshrl.u32 %v472, 7
    %v474 = vsub.s32 0, %v473
    %v475 = vrot.slane %v470, %v474
    %v476 = vlaneseq
    %v477 = vshrl.u32 %v476, 7
    %v478 = vsub.s32 1, %v477
    %v479 = vrot.slane %v470, %v478
    %v482 = vmul.f32 %v455, %v475
    %v483 = vmul.f32 %v453, %v479
    %v484 = vmul.f32 %v456, %v475
    %v485 = vmul.f32 %v454, %v479
    %v486 = vadd.f32 %v441, %v482
    %v487 = vadd.f32 %v442, %v483
    %v488 = vadd.f32 %v443, %v484
    %v489 = vadd.f32 %v444, %v485
    %s490 = scalar_lea.vmem [#allocation5], 21
    %v491 = vld [vmem:[%s490] ss:$8 sm:$0x3]
    %v493 = vlaneseq
    %v494 = vshrl.u32 %v493, 7
    %v495 = vsub.s32 0, %v494
    %v496 = vrot.slane %v491, %v495
    %v497 = vlaneseq
    %v498 = vshrl.u32 %v497, 7
    %v499 = vsub.s32 1, %v498
    %v500 = vrot.slane %v491, %v499
    %v503 = vmul.f32 %v320, %v496
    %v504 = vmul.f32 %v321, %v500
    %v505 = vmul.f32 %v322, %v496
    %v506 = vmul.f32 %v323, %v500
    %v507 = vadd.f32 %v486, %v503
    %v508 = vadd.f32 %v487, %v504
    %v509 = vadd.f32 %v488, %v505
    %v510 = vadd.f32 %v489, %v506
    %s511 = scalar_lea.vmem [#allocation5], 22
    %v512 = vld [vmem:[%s511] ss:$8 sm:$0x3]
    %v514 = vlaneseq
    %v515 = vshrl.u32 %v514, 7
    %v516 = vsub.s32 0, %v515
    %v517 = vrot.slane %v512, %v516
    %v518 = vlaneseq
    %v519 = vshrl.u32 %v518, 7
    %v520 = vsub.s32 1, %v519
    %v521 = vrot.slane %v512, %v520
    %v524 = vmul.f32 %v465, %v517
    %v525 = vmul.f32 %v467, %v521
    %v526 = vmul.f32 %v466, %v517
    %v527 = vmul.f32 %v468, %v521
    %v528 = vadd.f32 %v507, %v524
    %v529 = vadd.f32 %v508, %v525
    %v530 = vadd.f32 %v509, %v526
    %v531 = vadd.f32 %v510, %v527
    %532 = vrot.lane.b32.xlu0 %v344, 8
    %v533 = vpop.permute.xlu0 %532
    %534 = vrot.lane.b32.xlu0 %v352, 8
    %v535 = vpop.permute.xlu0 %534
    %536 = vrot.lane.b32.xlu0 %v347, 8
    %v537 = vpop.permute.xlu0 %536
    %538 = vrot.lane.b32.xlu0 %v353, 8
    %v539 = vpop.permute.xlu0 %538
    %v540 = vsel %vm364, %v533, %v537
    %v541 = vsel %vm364, %v535, %v539
    %v542 = vsel %vm364, %v537, %v533
    %v543 = vsel %vm364, %v539, %v535
    %544 = vrot.lane.b32.xlu0 %v344, 120
    %v545 = vpop.permute.xlu0 %544
    %546 = vrot.lane.b32.xlu0 %v352, 120
    %v547 = vpop.permute.xlu0 %546
    %548 = vrot.lane.b32.xlu0 %v347, 120
    %v549 = vpop.permute.xlu0 %548
    %550 = vrot.lane.b32.xlu0 %v353, 120
    %v551 = vpop.permute.xlu0 %550
    %v552 = vsel %vm377, %v545, %v549
    %v553 = vsel %vm377, %v547, %v551
    %v554 = vsel %vm377, %v549, %v545
    %v555 = vsel %vm377, %v551, %v547
    %s556 = scalar_lea.vmem [#allocation5], 23
    %v557 = vld [vmem:[%s556] ss:$8 sm:$0x3]
    %v559 = vlaneseq
    %v560 = vshrl.u32 %v559, 7
    %v561 = vsub.s32 0, %v560
    %v562 = vrot.slane %v557, %v561
    %v563 = vlaneseq
    %v564 = vshrl.u32 %v563, 7
    %v565 = vsub.s32 1, %v564
    %v566 = vrot.slane %v557, %v565
    %v569 = vmul.f32 %v542, %v562
    %v570 = vmul.f32 %v540, %v566
    %v571 = vmul.f32 %v543, %v562
    %v572 = vmul.f32 %v541, %v566
    %v573 = vadd.f32 %v528, %v569
    %v574 = vadd.f32 %v529, %v570
    %v575 = vadd.f32 %v530, %v571
    %v576 = vadd.f32 %v531, %v572
    %s577 = scalar_lea.vmem [#allocation5], 32
    %v578 = vld [vmem:[%s577] ss:$8 sm:$0x3]
    %v580 = vlaneseq
    %v581 = vshrl.u32 %v580, 7
    %v582 = vsub.s32 0, %v581
    %v583 = vrot.slane %v578, %v582
    %v584 = vlaneseq
    %v585 = vshrl.u32 %v584, 7
    %v586 = vsub.s32 1, %v585
    %v587 = vrot.slane %v578, %v586
    %v590 = vmul.f32 %v344, %v583
    %v591 = vmul.f32 %v347, %v587
    %v592 = vmul.f32 %v352, %v583
    %v593 = vmul.f32 %v353, %v587
    %v594 = vadd.f32 %v573, %v590
    %v595 = vadd.f32 %v574, %v591
    %v596 = vadd.f32 %v575, %v592
    %v597 = vadd.f32 %v576, %v593
    %s598 = scalar_lea.vmem [#allocation5], 33
    %v599 = vld [vmem:[%s598] ss:$8 sm:$0x3]
    %v601 = vlaneseq
    %v602 = vshrl.u32 %v601, 7
    %v603 = vsub.s32 0, %v602
    %v604 = vrot.slane %v599, %v603
    %v605 = vlaneseq
    %v606 = vshrl.u32 %v605, 7
    %v607 = vsub.s32 1, %v606
    %v608 = vrot.slane %v599, %v607
    %v611 = vmul.f32 %v552, %v604
    %v612 = vmul.f32 %v554, %v608
    %v613 = vmul.f32 %v553, %v604
    %v614 = vmul.f32 %v555, %v608
    %v615 = vadd.f32 %v594, %v611
    %v616 = vadd.f32 %v595, %v612
    %v617 = vadd.f32 %v596, %v613
    %v618 = vadd.f32 %v597, %v614
    %v619 = vld [vmem:[#allocation8] sm:$0xff]
    %v620 = vld [vmem:[#allocation8 + $0x8] sm:$0xff]
    %v621 = vld [vmem:[#allocation8 + $0x10] sm:$0xff]
    %v622 = vld [vmem:[#allocation8 + $0x18] sm:$0xff]
    %v623 = vld [vmem:[#allocation8 + $0x20] sm:$0xff]
    %v624 = vld [vmem:[#allocation8 + $0x28] sm:$0xff]
    %v625 = vld [vmem:[#allocation8 + $0x30] sm:$0xff]
    %v626 = vld [vmem:[#allocation8 + $0x38] sm:$0xff]
    %v627 = vld [vmem:[#allocation8 + $0x40] sm:$0xff]
    %v628 = vld [vmem:[#allocation8 + $0x48] sm:$0xff]
    %v629 = vld [vmem:[#allocation8 + $0x50] sm:$0xff]
    %v630 = vld [vmem:[#allocation8 + $0x58] sm:$0xff]
    %v631 = vld [vmem:[#allocation8 + $0x60] sm:$0xff]
    %v632 = vld [vmem:[#allocation8 + $0x68] sm:$0xff]
    %v633 = vld [vmem:[#allocation8 + $0x70] sm:$0xff]
    %v634 = vld [vmem:[#allocation8 + $0x78] sm:$0xff]
    %v635 = vld [vmem:[#allocation8 + $0x80] sm:$0xff]
    %v636 = vld [vmem:[#allocation8 + $0x88] sm:$0xff]
    %v637 = vld [vmem:[#allocation8 + $0x90] sm:$0xff]
    %v638 = vld [vmem:[#allocation8 + $0x98] sm:$0xff]
    %v639 = vld [vmem:[#allocation8 + $0xa0] sm:$0xff]
    %v640 = vld [vmem:[#allocation8 + $0xa8] sm:$0xff]
    %v641 = vld [vmem:[#allocation8 + $0xb0] sm:$0xff]
    %v642 = vld [vmem:[#allocation8 + $0xb8] sm:$0xff]
    %v643 = vld [vmem:[#allocation8 + $0xc0] sm:$0xff]
    %v644 = vld [vmem:[#allocation8 + $0xc8] sm:$0xff]
    %v645 = vld [vmem:[#allocation8 + $0xd0] sm:$0xff]
    %v646 = vld [vmem:[#allocation8 + $0xd8] sm:$0xff]
    %v647 = vld [vmem:[#allocation8 + $0xe0] sm:$0xff]
    %v648 = vld [vmem:[#allocation8 + $0xe8] sm:$0xff]
    %v649 = vld [vmem:[#allocation8 + $0xf0] sm:$0xff]
    %v650 = vld [vmem:[#allocation8 + $0xf8] sm:$0xff]
    %v651 = vld [vmem:[#allocation8 + $0x100] sm:$0xff]
    %v652 = vld [vmem:[#allocation8 + $0x108] sm:$0xff]
    %v653 = vld [vmem:[#allocation8 + $0x110] sm:$0xff]
    %v654 = vld [vmem:[#allocation8 + $0x118] sm:$0xff]
    %v655 = vld [vmem:[#allocation8 + $0x120] sm:$0xff]
    %v656 = vld [vmem:[#allocation8 + $0x128] sm:$0xff]
    %v657 = vld [vmem:[#allocation8 + $0x130] sm:$0xff]
    %v658 = vld [vmem:[#allocation8 + $0x138] sm:$0xff]
    %v659 = vld [vmem:[#allocation8 + $0x140] sm:$0xff]
    %v660 = vld [vmem:[#allocation8 + $0x148] sm:$0xff]
    %v661 = vld [vmem:[#allocation8 + $0x150] sm:$0xff]
    %v662 = vld [vmem:[#allocation8 + $0x158] sm:$0xff]
    %v663 = vld [vmem:[#allocation8 + $0x160] sm:$0xff]
    %v664 = vld [vmem:[#allocation8 + $0x168] sm:$0xff]
    %v665 = vld [vmem:[#allocation8 + $0x170] sm:$0xff]
    %v666 = vld [vmem:[#allocation8 + $0x178] sm:$0xff]
    %v667 = vld [vmem:[#allocation8 + $0x180] sm:$0xff]
    %v668 = vld [vmem:[#allocation8 + $0x188] sm:$0xff]
    %v669 = vld [vmem:[#allocation8 + $0x190] sm:$0xff]
    %v670 = vld [vmem:[#allocation8 + $0x198] sm:$0xff]
    %v671 = vld [vmem:[#allocation8 + $0x1a0] sm:$0xff]
    %v672 = vld [vmem:[#allocation8 + $0x1a8] sm:$0xff]
    %v673 = vld [vmem:[#allocation8 + $0x1b0] sm:$0xff]
    %v674 = vld [vmem:[#allocation8 + $0x1b8] sm:$0xff]
    %v675 = vld [vmem:[#allocation8 + $0x1c0] sm:$0xff]
    %v676 = vld [vmem:[#allocation8 + $0x1c8] sm:$0xff]
    %v677 = vld [vmem:[#allocation8 + $0x1d0] sm:$0xff]
    %v678 = vld [vmem:[#allocation8 + $0x1d8] sm:$0xff]
    %v679 = vld [vmem:[#allocation8 + $0x1e0] sm:$0xff]
    %v680 = vld [vmem:[#allocation8 + $0x1e8] sm:$0xff]
    %v681 = vld [vmem:[#allocation8 + $0x1f0] sm:$0xff]
    %v682 = vld [vmem:[#allocation8 + $0x1f8] sm:$0xff]
    %v684 = vlaneseq
    %v685 = vshrl.u32 %v684, 7
    %v686 = vsub.s32 0, %v685
    %v687 = vrot.slane %v325, %v686
    %v688 = vlaneseq
    %v689 = vshrl.u32 %v688, 7
    %v690 = vsub.s32 1, %v689
    %v691 = vrot.slane %v325, %v690
    %694 = vmatprep.subr.mxu0 %v620
    %695 = vmatpush1.msra.mxu0 %v619
    %696 = vmatprep.subr.mxu0 %v622
    %697 = vmatpush1.msra.mxu0 %v621
    %698 = vmatprep.subr.mxu0 %v624
    %699 = vmatpush1.msra.mxu0 %v623
    %700 = vmatprep.subr.mxu0 %v626
    %701 = vmatpush1.msra.mxu0 %v625
    %702 = vmatprep.subr.mxu0 %v628
    %703 = vmatpush1.msra.mxu0 %v627
    %704 = vmatprep.subr.mxu0 %v630
    %705 = vmatpush1.msra.mxu0 %v629
    %706 = vmatprep.subr.mxu0 %v632
    %707 = vmatpush1.msra.mxu0 %v631
    %708 = vmatprep.subr.mxu0 %v634
    %709 = vmatpush1.msra.mxu0 %v633
    %710 = vmatprep.subr.mxu0 %v636
    %711 = vmatpush1.msra.mxu0 %v635
    %712 = vmatprep.subr.mxu0 %v638
    %713 = vmatpush1.msra.mxu0 %v637
    %714 = vmatprep.subr.mxu0 %v640
    %715 = vmatpush1.msra.mxu0 %v639
    %716 = vmatprep.subr.mxu0 %v642
    %717 = vmatpush1.msra.mxu0 %v641
    %718 = vmatprep.subr.mxu0 %v644
    %719 = vmatpush1.msra.mxu0 %v643
    %720 = vmatprep.subr.mxu0 %v646
    %721 = vmatpush1.msra.mxu0 %v645
    %722 = vmatprep.subr.mxu0 %v648
    %723 = vmatpush1.msra.mxu0 %v647
    %724 = vmatprep.subr.mxu0 %v650
    %725 = vmatpush1.msra.mxu0 %v649
    %726 = vmatprep.subr.mxu0 %v652
    %727 = vmatpush1.msra.mxu0 %v651
    %728 = vmatprep.subr.mxu0 %v654
    %729 = vmatpush1.msra.mxu0 %v653
    %730 = vmatprep.subr.mxu0 %v656
    %731 = vmatpush1.msra.mxu0 %v655
    %732 = vmatprep.subr.mxu0 %v658
    %733 = vmatpush1.msra.mxu0 %v657
    %734 = vmatprep.subr.mxu0 %v660
    %735 = vmatpush1.msra.mxu0 %v659
    %736 = vmatprep.subr.mxu0 %v662
    %737 = vmatpush1.msra.mxu0 %v661
    %738 = vmatprep.subr.mxu0 %v664
    %739 = vmatpush1.msra.mxu0 %v663
    %740 = vmatprep.subr.mxu0 %v666
    %741 = vmatpush1.msra.mxu0 %v665
    %742 = vmatprep.subr.mxu0 %v668
    %743 = vmatpush1.msra.mxu0 %v667
    %744 = vmatprep.subr.mxu0 %v670
    %745 = vmatpush1.msra.mxu0 %v669
    %746 = vmatprep.subr.mxu0 %v672
    %747 = vmatpush1.msra.mxu0 %v671
    %748 = vmatprep.subr.mxu0 %v674
    %749 = vmatpush1.msra.mxu0 %v673
    %750 = vmatprep.subr.mxu0 %v676
    %751 = vmatpush1.msra.mxu0 %v675
    %752 = vmatprep.subr.mxu0 %v678
    %753 = vmatpush1.msra.mxu0 %v677
    %754 = vmatprep.subr.mxu0 %v680
    %755 = vmatpush1.msra.mxu0 %v679
    %756 = vmatprep.subr.mxu0 %v682
    %757 = vmatpush1.msra.mxu0 %v681
    %758 = vmatprep.mubr.f32.mxu0 %v616
    %759 = vmatmul.mubr.f32.gmra.mrb[0].mxu0 %v615
    %v760 = vpop.f32.mrb[0].mxu0
    %v761 = vadd.f32 %v687, %v760
    %v762 = vpop.f32.mrb[0].mxu0
    %v763 = vadd.f32 %v691, %v762
    %764 = vmatprep.mubr.f32.mxu0 %v618
    %765 = vmatmul.mubr.f32.gmra.mrb[0].mxu0 %v617
    %v766 = vpop.f32.mrb[0].mxu0
    %v767 = vadd.f32 %v687, %v766
    %v768 = vpop.f32.mrb[0].mxu0
    %v769 = vadd.f32 %v691, %v768
    %770 = vdwg.mxu0
    %v775 = vrot.slane %v761, 7
    %v776 = vrot.slane %v763, 7
    %v777 = vrot.slane %v767, 7
    %v778 = vsel %vm117, %v775, %v777
    %v779 = vrot.slane %v769, 7
    %v780 = vsel %vm117, %v776, %v779
    %v785 = vsel %vm117, -inf, %v775
    %v786 = vsel %vm117, -inf, %v776
    %v787 = vrot.slane %v761, 1
    %v788 = vrot.slane %v767, 1
    %v789 = vsel %vm124, %v787, %v788
    %v790 = vrot.slane %v763, 1
    %v791 = vrot.slane %v769, 1
    %v792 = vsel %vm124, %v790, %v791
    %v797 = vsel %vm124, %v788, -inf
    %v798 = vsel %vm124, %v791, -inf
    %v799 = vmax.f32 %v785, %v761
    %v800 = vmax.f32 %v786, %v763
    %v801 = vmax.f32 %v778, %v767
    %v802 = vmax.f32 %v780, %v769
    %v803 = vmax.f32 %v799, %v789
    %v804 = vmax.f32 %v800, %v792
    %v805 = vmax.f32 %v801, %v797
    %v806 = vmax.f32 %v802, %v798
    %v807 = vld [vmem:[%s5] sm:$0xff]
    %vm808 = vcmask 130048
    %v810 = vsel %vm808, %v807, 0
    %812 = vmatprep.subr.mxu0 %v804
    %813 = vmatpush1.msra.mxu0 %v803
    %814 = vmatprep.subr.mxu0 %v806
    %815 = vmatpush1.msra.mxu0 %v805
    %816 = vmatprep.subr.mxu0 0.0
    %817 = vmatpush1.msra.mxu0 0.0
    %818 = vmatprep.subr.mxu0 0.0
    %819 = vmatpush1.msra.mxu0 0.0
    %820 = vmatprep.subr.mxu0 0.0
    %821 = vmatpush1.msra.mxu0 0.0
    %822 = vmatprep.subr.mxu0 0.0
    %823 = vmatpush1.msra.mxu0 0.0
    %824 = vmatprep.subr.mxu0 0.0
    %825 = vmatpush1.msra.mxu0 0.0
    %826 = vmatprep.subr.mxu0 0.0
    %827 = vmatpush1.msra.mxu0 0.0
    %828 = vmatprep.subr.mxu0 0.0
    %829 = vmatpush1.msra.mxu0 0.0
    %830 = vmatprep.subr.mxu0 0.0
    %831 = vmatpush1.msra.mxu0 0.0
    %832 = vmatprep.subr.mxu0 0.0
    %833 = vmatpush1.msra.mxu0 0.0
    %834 = vmatprep.subr.mxu0 0.0
    %835 = vmatpush1.msra.mxu0 0.0
    %836 = vmatprep.subr.mxu0 0.0
    %837 = vmatpush1.msra.mxu0 0.0
    %838 = vmatprep.subr.mxu0 0.0
    %839 = vmatpush1.msra.mxu0 0.0
    %840 = vmatprep.subr.mxu0 0.0
    %841 = vmatpush1.msra.mxu0 0.0
    %842 = vmatprep.subr.mxu0 0.0
    %843 = vmatpush1.msra.mxu0 0.0
    %844 = vmatprep.subr.mxu0 0.0
    %845 = vmatpush1.msra.mxu0 0.0
    %846 = vmatprep.subr.mxu0 0.0
    %847 = vmatpush1.msra.mxu0 0.0
    %848 = vmatprep.subr.mxu0 0.0
    %849 = vmatpush1.msra.mxu0 0.0
    %850 = vmatprep.subr.mxu0 0.0
    %851 = vmatpush1.msra.mxu0 0.0
    %852 = vmatprep.subr.mxu0 0.0
    %853 = vmatpush1.msra.mxu0 0.0
    %854 = vmatprep.subr.mxu0 0.0
    %855 = vmatpush1.msra.mxu0 0.0
    %856 = vmatprep.subr.mxu0 0.0
    %857 = vmatpush1.msra.mxu0 0.0
    %858 = vmatprep.subr.mxu0 0.0
    %859 = vmatpush1.msra.mxu0 0.0
    %860 = vmatprep.subr.mxu0 0.0
    %861 = vmatpush1.msra.mxu0 0.0
    %862 = vmatprep.subr.mxu0 0.0
    %863 = vmatpush1.msra.mxu0 0.0
    %864 = vmatprep.subr.mxu0 0.0
    %865 = vmatpush1.msra.mxu0 0.0
    %866 = vmatprep.subr.mxu0 0.0
    %867 = vmatpush1.msra.mxu0 0.0
    %868 = vmatprep.subr.mxu0 0.0
    %869 = vmatpush1.msra.mxu0 0.0
    %870 = vmatprep.subr.mxu0 0.0
    %871 = vmatpush1.msra.mxu0 0.0
    %872 = vmatprep.subr.mxu0 0.0
    %873 = vmatpush1.msra.mxu0 0.0
    %874 = vmatprep.subr.mxu0 0.0
    %875 = vmatpush1.msra.mxu0 0.0
    %876 = vmatprep.mubr.f32.mxu0 0.0
    %877 = vmatmul.mubr.f32.gmra.mrb[0].mxu0 %v810
    %v878 = vpop.f32.mrb[0].mxu0
    %v879 = vadd.f32 0.0, %v878
    %v880 = vpop.f32.mrb[0].mxu0
    %v881 = vadd.f32 0.0, %v880
    %882 = vdwg.mxu0
    %883 = vrot.lane.b32.xlu0 %v879, 8
    %v884 = vpop.permute.xlu0 %883
    %885 = vrot.lane.b32.xlu0 %v881, 8
    %v886 = vpop.permute.xlu0 %885
    %v887 = vsel %vm364, %v884, %v886
    %v888 = vsel %vm364, %v886, %v884
    %s889 = scalar_lea.vmem [#allocation5], 37
    %v890 = vld [vmem:[%s889] ss:$8 sm:$0x3]
    %v892 = vlaneseq
    %v893 = vshrl.u32 %v892, 7
    %v894 = vsub.s32 0, %v893
    %v895 = vrot.slane %v890, %v894
    %v896 = vlaneseq
    %v897 = vshrl.u32 %v896, 7
    %v898 = vsub.s32 1, %v897
    %v899 = vrot.slane %v890, %v898
    %v902 = vadd.f32 %v888, %v895
    %v903 = vadd.f32 %v887, %v899
    %904 = vrot.lane.b32.xlu0 %v879, 120
    %v905 = vpop.permute.xlu0 %904
    %906 = vrot.lane.b32.xlu0 %v881, 120
    %v907 = vpop.permute.xlu0 %906
    %v908 = vsel %vm377, %v905, %v907
    %v909 = vsel %vm377, %v907, %v905
    %s910 = scalar_lea.vmem [#allocation5], 38
    %v911 = vld [vmem:[%s910] ss:$8 sm:$0x3]
    %v913 = vlaneseq
    %v914 = vshrl.u32 %v913, 7
    %v915 = vsub.s32 0, %v914
    %v916 = vrot.slane %v911, %v915
    %v917 = vlaneseq
    %v918 = vshrl.u32 %v917, 7
    %v919 = vsub.s32 1, %v918
    %v920 = vrot.slane %v911, %v919
    %v923 = vadd.f32 %v908, %v916
    %v924 = vadd.f32 %v909, %v920
    %v925 = vmax.f32 %v902, %v879
    %v926 = vmax.f32 %v903, %v881
    %v927 = vmax.f32 %v925, %v923
    %v928 = vmax.f32 %v926, %v924
    %v929 = vld [vmem:[#allocation11] sm:$0xff]
    %v930 = vld [vmem:[#allocation11 + $0x8] sm:$0xff]
    %v931 = vld [vmem:[#allocation11 + $0x10] sm:$0xff]
    %v932 = vld [vmem:[#allocation11 + $0x18] sm:$0xff]
    %v933 = vld [vmem:[#allocation11 + $0x20] sm:$0xff]
    %v934 = vld [vmem:[#allocation11 + $0x28] sm:$0xff]
    %v935 = vld [vmem:[#allocation11 + $0x30] sm:$0xff]
    %v936 = vld [vmem:[#allocation11 + $0x38] sm:$0xff]
    %v937 = vld [vmem:[#allocation11 + $0x40] sm:$0xff]
    %v938 = vld [vmem:[#allocation11 + $0x48] sm:$0xff]
    %v939 = vld [vmem:[#allocation11 + $0x50] sm:$0xff]
    %v940 = vld [vmem:[#allocation11 + $0x58] sm:$0xff]
    %v941 = vld [vmem:[#allocation11 + $0x60] sm:$0xff]
    %v942 = vld [vmem:[#allocation11 + $0x68] sm:$0xff]
    %v943 = vld [vmem:[#allocation11 + $0x70] sm:$0xff]
    %v944 = vld [vmem:[#allocation11 + $0x78] sm:$0xff]
    %v945 = vld [vmem:[#allocation11 + $0x80] sm:$0xff]
    %v946 = vld [vmem:[#allocation11 + $0x88] sm:$0xff]
    %v947 = vld [vmem:[#allocation11 + $0x90] sm:$0xff]
    %v948 = vld [vmem:[#allocation11 + $0x98] sm:$0xff]
    %v949 = vld [vmem:[#allocation11 + $0xa0] sm:$0xff]
    %v950 = vld [vmem:[#allocation11 + $0xa8] sm:$0xff]
    %v951 = vld [vmem:[#allocation11 + $0xb0] sm:$0xff]
    %v952 = vld [vmem:[#allocation11 + $0xb8] sm:$0xff]
    %v953 = vld [vmem:[#allocation11 + $0xc0] sm:$0xff]
    %v954 = vld [vmem:[#allocation11 + $0xc8] sm:$0xff]
    %v955 = vld [vmem:[#allocation11 + $0xd0] sm:$0xff]
    %v956 = vld [vmem:[#allocation11 + $0xd8] sm:$0xff]
    %v957 = vld [vmem:[#allocation11 + $0xe0] sm:$0xff]
    %v958 = vld [vmem:[#allocation11 + $0xe8] sm:$0xff]
    %v959 = vld [vmem:[#allocation11 + $0xf0] sm:$0xff]
    %v960 = vld [vmem:[#allocation11 + $0xf8] sm:$0xff]
    %961 = vmatprep.subr.mxu0 0.0
    %962 = vmatpush1.msra.mxu0 %v109
    %963 = vmatprep.subr.mxu0 0.0
    %964 = vmatpush1.msra.mxu0 %v110
    %965 = vmatprep.subr.mxu0 0.0
    %966 = vmatpush1.msra.mxu0 0.0
    %967 = vmatprep.subr.mxu0 0.0
    %968 = vmatpush1.msra.mxu0 0.0
    %969 = vmatprep.subr.mxu0 0.0
    %970 = vmatpush1.msra.mxu0 0.0
    %971 = vmatprep.subr.mxu0 0.0
    %972 = vmatpush1.msra.mxu0 0.0
    %973 = vmatprep.subr.mxu0 0.0
    %974 = vmatpush1.msra.mxu0 0.0
    %975 = vmatprep.subr.mxu0 0.0
    %976 = vmatpush1.msra.mxu0 0.0
    %977 = vmatprep.subr.mxu0 0.0
    %978 = vmatpush1.msra.mxu0 0.0
    %979 = vmatprep.subr.mxu0 0.0
    %980 = vmatpush1.msra.mxu0 0.0
    %981 = vmatprep.subr.mxu0 0.0
    %982 = vmatpush1.msra.mxu0 0.0
    %983 = vmatprep.subr.mxu0 0.0
    %984 = vmatpush1.msra.mxu0 0.0
    %985 = vmatprep.subr.mxu0 0.0
    %986 = vmatpush1.msra.mxu0 0.0
    %987 = vmatprep.subr.mxu0 0.0
    %988 = vmatpush1.msra.mxu0 0.0
    %989 = vmatprep.subr.mxu0 0.0
    %990 = vmatpush1.msra.mxu0 0.0
    %991 = vmatprep.subr.mxu0 0.0
    %992 = vmatpush1.msra.mxu0 0.0
    %993 = vmatprep.subr.mxu0 0.0
    %994 = vmatpush1.msra.mxu0 0.0
    %995 = vmatprep.subr.mxu0 0.0
    %996 = vmatpush1.msra.mxu0 0.0
    %997 = vmatprep.subr.mxu0 0.0
    %998 = vmatpush1.msra.mxu0 0.0
    %999 = vmatprep.subr.mxu0 0.0
    %1000 = vmatpush1.msra.mxu0 0.0
    %1001 = vmatprep.subr.mxu0 0.0
    %1002 = vmatpush1.msra.mxu0 0.0
    %1003 = vmatprep.subr.mxu0 0.0
    %1004 = vmatpush1.msra.mxu0 0.0
    %1005 = vmatprep.subr.mxu0 0.0
    %1006 = vmatpush1.msra.mxu0 0.0
    %1007 = vmatprep.subr.mxu0 0.0
    %1008 = vmatpush1.msra.mxu0 0.0
    %1009 = vmatprep.subr.mxu0 0.0
    %1010 = vmatpush1.msra.mxu0 0.0
    %1011 = vmatprep.subr.mxu0 0.0
    %1012 = vmatpush1.msra.mxu0 0.0
    %1013 = vmatprep.subr.mxu0 0.0
    %1014 = vmatpush1.msra.mxu0 0.0
    %1015 = vmatprep.subr.mxu0 0.0
    %1016 = vmatpush1.msra.mxu0 0.0
    %1017 = vmatprep.subr.mxu0 0.0
    %1018 = vmatpush1.msra.mxu0 0.0
    %1019 = vmatprep.subr.mxu0 0.0
    %1020 = vmatpush1.msra.mxu0 0.0
    %1021 = vmatprep.subr.mxu0 0.0
    %1022 = vmatpush1.msra.mxu0 0.0
    %1023 = vmatprep.subr.mxu0 0.0
    %1024 = vmatpush1.msra.mxu0 0.0
    %1025 = vmatprep.mubr.f32.mxu0 0.0
    %1026 = vmatmul.mubr.f32.gmra.mrb[0].mxu0 %v810
    %v1027 = vpop.f32.mrb[0].mxu0
    %v1028 = vadd.f32 0.0, %v1027
    %v1029 = vpop.f32.mrb[0].mxu0
    %1030 = vdwg.mxu0
    %v1031 = vld [vmem:[#allocation10] sm:$0xff]
    %v1032 = vld [vmem:[#allocation10 + $0x8] sm:$0xff]
    %v1033 = vld [vmem:[#allocation10 + $0x10] sm:$0xff]
    %v1034 = vld [vmem:[#allocation10 + $0x18] sm:$0xff]
    %v1035 = vld [vmem:[#allocation10 + $0x20] sm:$0xff]
    %v1036 = vld [vmem:[#allocation10 + $0x28] sm:$0xff]
    %v1037 = vld [vmem:[#allocation10 + $0x30] sm:$0xff]
    %v1038 = vld [vmem:[#allocation10 + $0x38] sm:$0xff]
    %v1039 = vld [vmem:[#allocation10 + $0x40] sm:$0xff]
    %v1040 = vld [vmem:[#allocation10 + $0x48] sm:$0xff]
    %v1041 = vld [vmem:[#allocation10 + $0x50] sm:$0xff]
    %v1042 = vld [vmem:[#allocation10 + $0x58] sm:$0xff]
    %v1043 = vld [vmem:[#allocation10 + $0x60] sm:$0xff]
    %v1044 = vld [vmem:[#allocation10 + $0x68] sm:$0xff]
    %v1045 = vld [vmem:[#allocation10 + $0x70] sm:$0xff]
    %v1046 = vld [vmem:[#allocation10 + $0x78] sm:$0xff]
    %v1047 = vld [vmem:[#allocation5 + $0x24] ss:$0 sm:$0xff]
    %1048 = vmatprep.subr.mxu0 0.0
    %1049 = vmatpush1.msra.mxu0 %v1031
    %1050 = vmatprep.subr.mxu0 0.0
    %1051 = vmatpush1.msra.mxu0 %v1032
    %1052 = vmatprep.subr.mxu0 0.0
    %1053 = vmatpush1.msra.mxu0 %v1033
    %1054 = vmatprep.subr.mxu0 0.0
    %1055 = vmatpush1.msra.mxu0 %v1034
    %1056 = vmatprep.subr.mxu0 0.0
    %1057 = vmatpush1.msra.mxu0 %v1035
    %1058 = vmatprep.subr.mxu0 0.0
    %1059 = vmatpush1.msra.mxu0 %v1036
    %1060 = vmatprep.subr.mxu0 0.0
    %1061 = vmatpush1.msra.mxu0 %v1037
    %1062 = vmatprep.subr.mxu0 0.0
    %1063 = vmatpush1.msra.mxu0 %v1038
    %1064 = vmatprep.subr.mxu0 0.0
    %1065 = vmatpush1.msra.mxu0 %v1039
    %1066 = vmatprep.subr.mxu0 0.0
    %1067 = vmatpush1.msra.mxu0 %v1040
    %1068 = vmatprep.subr.mxu0 0.0
    %1069 = vmatpush1.msra.mxu0 %v1041
    %1070 = vmatprep.subr.mxu0 0.0
    %1071 = vmatpush1.msra.mxu0 %v1042
    %1072 = vmatprep.subr.mxu0 0.0
    %1073 = vmatpush1.msra.mxu0 %v1043
    %1074 = vmatprep.subr.mxu0 0.0
    %1075 = vmatpush1.msra.mxu0 %v1044
    %1076 = vmatprep.subr.mxu0 0.0
    %1077 = vmatpush1.msra.mxu0 %v1045
    %1078 = vmatprep.subr.mxu0 0.0
    %1079 = vmatpush1.msra.mxu0 %v1046
    %1080 = vmatprep.subr.mxu0 0.0
    %1081 = vmatpush1.msra.mxu0 0.0
    %1082 = vmatprep.subr.mxu0 0.0
    %1083 = vmatpush1.msra.mxu0 0.0
    %1084 = vmatprep.subr.mxu0 0.0
    %1085 = vmatpush1.msra.mxu0 0.0
    %1086 = vmatprep.subr.mxu0 0.0
    %1087 = vmatpush1.msra.mxu0 0.0
    %1088 = vmatprep.subr.mxu0 0.0
    %1089 = vmatpush1.msra.mxu0 0.0
    %1090 = vmatprep.subr.mxu0 0.0
    %1091 = vmatpush1.msra.mxu0 0.0
    %1092 = vmatprep.subr.mxu0 0.0
    %1093 = vmatpush1.msra.mxu0 0.0
    %1094 = vmatprep.subr.mxu0 0.0
    %1095 = vmatpush1.msra.mxu0 0.0
    %1096 = vmatprep.subr.mxu0 0.0
    %1097 = vmatpush1.msra.mxu0 0.0
    %1098 = vmatprep.subr.mxu0 0.0
    %1099 = vmatpush1.msra.mxu0 0.0
    %1100 = vmatprep.subr.mxu0 0.0
    %1101 = vmatpush1.msra.mxu0 0.0
    %1102 = vmatprep.subr.mxu0 0.0
    %1103 = vmatpush1.msra.mxu0 0.0
    %1104 = vmatprep.subr.mxu0 0.0
    %1105 = vmatpush1.msra.mxu0 0.0
    %1106 = vmatprep.subr.mxu0 0.0
    %1107 = vmatpush1.msra.mxu0 0.0
    %1108 = vmatprep.subr.mxu0 0.0
    %1109 = vmatpush1.msra.mxu0 0.0
    %1110 = vmatprep.subr.mxu0 0.0
    %1111 = vmatpush1.msra.mxu0 0.0
    %1112 = vmatprep.mubr.f32.mxu0 0.0
    %1113 = vmatmul.mubr.f32.gmra.mrb[0].mxu0 %v1028
    %v1114 = vpop.f32.mrb[0].mxu0
    %v1115 = vadd.f32 %v1047, %v1114
    %v1116 = vpop.f32.mrb[0].mxu0
    %1117 = vdwg.mxu0
    %1118 = vmatprep.subr.mxu0 0.0
    %1119 = vmatpush1.msra.mxu0 %v929
    %1120 = vmatprep.subr.mxu0 0.0
    %1121 = vmatpush1.msra.mxu0 %v930
    %1122 = vmatprep.subr.mxu0 0.0
    %1123 = vmatpush1.msra.mxu0 %v931
    %1124 = vmatprep.subr.mxu0 0.0
    %1125 = vmatpush1.msra.mxu0 %v932
    %1126 = vmatprep.subr.mxu0 0.0
    %1127 = vmatpush1.msra.mxu0 %v933
    %1128 = vmatprep.subr.mxu0 0.0
    %1129 = vmatpush1.msra.mxu0 %v934
    %1130 = vmatprep.subr.mxu0 0.0
    %1131 = vmatpush1.msra.mxu0 %v935
    %1132 = vmatprep.subr.mxu0 0.0
    %1133 = vmatpush1.msra.mxu0 %v936
    %1134 = vmatprep.subr.mxu0 0.0
    %1135 = vmatpush1.msra.mxu0 %v937
    %1136 = vmatprep.subr.mxu0 0.0
    %1137 = vmatpush1.msra.mxu0 %v938
    %1138 = vmatprep.subr.mxu0 0.0
    %1139 = vmatpush1.msra.mxu0 %v939
    %1140 = vmatprep.subr.mxu0 0.0
    %1141 = vmatpush1.msra.mxu0 %v940
    %1142 = vmatprep.subr.mxu0 0.0
    %1143 = vmatpush1.msra.mxu0 %v941
    %1144 = vmatprep.subr.mxu0 0.0
    %1145 = vmatpush1.msra.mxu0 %v942
    %1146 = vmatprep.subr.mxu0 0.0
    %1147 = vmatpush1.msra.mxu0 %v943
    %1148 = vmatprep.subr.mxu0 0.0
    %1149 = vmatpush1.msra.mxu0 %v944
    %1150 = vmatprep.subr.mxu0 0.0
    %1151 = vmatpush1.msra.mxu0 %v945
    %1152 = vmatprep.subr.mxu0 0.0
    %1153 = vmatpush1.msra.mxu0 %v946
    %1154 = vmatprep.subr.mxu0 0.0
    %1155 = vmatpush1.msra.mxu0 %v947
    %1156 = vmatprep.subr.mxu0 0.0
    %1157 = vmatpush1.msra.mxu0 %v948
    %1158 = vmatprep.subr.mxu0 0.0
    %1159 = vmatpush1.msra.mxu0 %v949
    %1160 = vmatprep.subr.mxu0 0.0
    %1161 = vmatpush1.msra.mxu0 %v950
    %1162 = vmatprep.subr.mxu0 0.0
    %1163 = vmatpush1.msra.mxu0 %v951
    %1164 = vmatprep.subr.mxu0 0.0
    %1165 = vmatpush1.msra.mxu0 %v952
    %1166 = vmatprep.subr.mxu0 0.0
    %1167 = vmatpush1.msra.mxu0 %v953
    %1168 = vmatprep.subr.mxu0 0.0
    %1169 = vmatpush1.msra.mxu0 %v954
    %1170 = vmatprep.subr.mxu0 0.0
    %1171 = vmatpush1.msra.mxu0 %v955
    %1172 = vmatprep.subr.mxu0 0.0
    %1173 = vmatpush1.msra.mxu0 %v956
    %1174 = vmatprep.subr.mxu0 0.0
    %1175 = vmatpush1.msra.mxu0 %v957
    %1176 = vmatprep.subr.mxu0 0.0
    %1177 = vmatpush1.msra.mxu0 %v958
    %1178 = vmatprep.subr.mxu0 0.0
    %1179 = vmatpush1.msra.mxu0 %v959
    %1180 = vmatprep.subr.mxu0 0.0
    %1181 = vmatpush1.msra.mxu0 %v960
    %1182 = vmatprep.mubr.f32.mxu0 %v928
    %1183 = vmatmul.mubr.f32.gmra.mrb[0].mxu0 %v927
    %v1184 = vpop.f32.mrb[0].mxu0
    %v1185 = vadd.f32 %v1115, %v1184
    %v1186 = vpop.f32.mrb[0].mxu0
    %1187 = vdwg.mxu0
    %1188 = vst [vmem:[#allocation13] sm:$0xff] %v1185
    // Predicated region
    $region54: #{tpu_custom_call.1} parent=1 // pred_check
      _
    $region55: #{tpu_custom_call.1} parent=1 // pred_check_branch
      %1190 = sbr.rel (0) target = $region57
    $region56: #{tpu_custom_call.1} parent=1 // pred_region
      %s1192 = ssub.s32 128, 128
      %1193 = vsyncadd [#allocation4], %s1192
      %s1195 = sshll.u32 [#allocation13], 4
      %s1196 = int_to_ptr.vmem [resolvable:$true] %s1195
      %1198 = dma.vmem_to_hbm [thread:$0]  %s1196, 128, %s7, [#allocation4]
    $region57: #{tpu_custom_call.1} parent=1 // pred_fallthru
      _
    // Predicated region
    $region58: #{tpu_custom_call.1} parent=1 // pred_check
      _
    $region59: #{tpu_custom_call.1} parent=1 // pred_check_branch
      %1200 = sbr.rel (0) target = $region61
    $region60: #{tpu_custom_call.1} parent=1 // pred_region
      %1201 = dma.done [#allocation4], 128
    $region61: #{tpu_custom_call.1} parent=1 // pred_fallthru
      _
    %1202 = vsyncpa [#allocation3], 1
    %1203 = vsyncpa [#allocation6], 1
    %1204 = vsyncpa [#allocation9], 1
    %1205 = vsyncpa [#allocation12], 1
    %1206 = vsyncpa [#allocation4], 1

</llo_original>
